<compile_context>
chip_gen: v6e
topology: v6e:2x2x1
jax: 0.10.0
libtpu: 0.0.40
codegen_flags: <defaults>
</compile_context>

<pallas_src>
import functools
import math

import jax
import jax.numpy as jnp
from jax.experimental import pallas as pl
from jax.experimental.pallas import tpu as pltpu


def _round_up(v, m):
    return (v + m - 1) // m * m


# -----------------------------------------------------------------------------
# Primary kernel: channels-first (lane-dense) compute, feature-last output.
# -----------------------------------------------------------------------------
def _fourier_cf_kernel(x_ref, w_ref, o_ref, *, input_dim, per_channel_dim,
                       out_dim, pad_rows):
    # x_ref: (input_dim, tile)   channels-first input (row index on lanes)
    # w_ref: (freq_dim, 1)       2*pi*weights, tiled per channel
    # o_ref: (tile, out_dim)     feature-last output block
    x = x_ref[...].astype(jnp.float32)                     # (C, t)
    t = x.shape[-1]
    p = per_channel_dim

    # Expand each input channel across `p` sublanes (pure VPU, no MXU):
    #   xb[c*p + j, :] = x[c, :]
    xb = jnp.concatenate(
        [jnp.broadcast_to(x[c:c + 1, :], (p, t)) for c in range(input_dim)],
        axis=0)                                            # (freq_dim, t)
    phases = xb * w_ref[...]                               # x_c * 2*pi*w_j

    # Fully lane-dense transcendental work (the dominant VALU cost).
    sin_p = jnp.sin(phases)
    cos_p = jnp.cos(phases)

    # Channels-first output block [x | sin | cos], padded to a multiple of 8
    # sublanes so the XLU transpose below runs on aligned granules.
    pieces = [x, sin_p, cos_p]
    if pad_rows > out_dim:
        pieces.append(jnp.zeros((pad_rows - out_dim, t), jnp.float32))
    out_cf = jnp.concatenate(pieces, axis=0)               # (pad_rows, t)

    # XLU transpose back to feature-last right before the store; the XLU slot
    # is idle in this kernel so this hides under the sin/cos VALU work.
    out_ft = jnp.transpose(out_cf)                         # (t, pad_rows)
    o_ref[...] = out_ft[:, :out_dim].astype(o_ref.dtype)


def _embed_lane_dense(x2d, weights, *, tile_rows, out_dtype):
    n_rows, input_dim = x2d.shape
    per_channel_dim = weights.shape[0]
    freq_dim = input_dim * per_channel_dim
    out_dim = input_dim + 2 * freq_dim
    pad_rows = _round_up(out_dim, 8)

    # Rows ride the 128-wide lane axis -> the tile must be a multiple of 128.
    tile = _round_up(max(int(tile_rows), 128), 128)
    # v7x megacore: keep at least 2 blocks on the parallel grid axis when
    # there is enough data so both TensorCores get work (no-op on v5e/v6e).
    tile = min(tile, _round_up(pl.cdiv(n_rows, 2), 128))
    grid_rows = pl.cdiv(n_rows, tile)
    # Ragged last block: out-of-bounds lanes are read as garbage and the
    # corresponding out-of-bounds output rows are dropped; the compute never
    # mixes different row indices, so valid rows are unaffected.

    # 2*pi*weights tiled per channel, applied as a per-sublane column scale.
    w_col = (2.0 * jnp.pi) * jnp.tile(
        weights.astype(jnp.float32), (input_dim,)).reshape(freq_dim, 1)

    # Layout plumbing only: channels-first view of the tiny input
    # (12 B/row vs ~204 B/row of output).
    # TODO(synk): have the producer emit x channels-first to drop this pass.
    x_cf = x2d.T                                            # (input_dim, n_rows)

    kernel = functools.partial(
        _fourier_cf_kernel, input_dim=input_dim,
        per_channel_dim=per_channel_dim, out_dim=out_dim, pad_rows=pad_rows)

    return pl.pallas_call(
        kernel,
        out_shape=jax.ShapeDtypeStruct((n_rows, out_dim), out_dtype),
        grid_spec=pltpu.PrefetchScalarGridSpec(
            num_scalar_prefetch=0,
            grid=(grid_rows,),
            in_specs=[
                pl.BlockSpec((input_dim, tile), lambda i: (0, i)),
                # Constant block index -> fetched once, stays VMEM-resident.
                pl.BlockSpec((freq_dim, 1), lambda i: (0, 0)),
            ],
            out_specs=pl.BlockSpec((tile, out_dim), lambda i: (i, 0)),
        ),
        compiler_params=pltpu.CompilerParams(
            dimension_semantics=("parallel",),
        ),
    )(x_cf, w_col)


# -----------------------------------------------------------------------------
# Fallback kernel: feature-last compute (still no MXU, no transpose).  Only
# used if the lane-dense path cannot be lowered by the local Mosaic build.
# -----------------------------------------------------------------------------
def _fourier_fl_kernel(x_ref, w_ref, o_ref, *, input_dim, per_channel_dim):
    x = x_ref[...].astype(jnp.float32)                     # (tm, C)
    tm = x.shape[0]
    p = per_channel_dim
    # xe[:, c*p + j] = x[:, c]  (lane broadcast per channel, pure VPU)
    xe = jnp.concatenate(
        [jnp.broadcast_to(x[:, c:c + 1], (tm, p)) for c in range(input_dim)],
        axis=-1)                                           # (tm, freq_dim)
    phases = xe * w_ref[...]                               # (1, freq_dim) scale
    o_ref[...] = jnp.concatenate(
        [x, jnp.sin(phases), jnp.cos(phases)], axis=-1).astype(o_ref.dtype)


def _embed_feature_last(x2d, weights, *, tile_rows, out_dtype):
    n_rows, input_dim = x2d.shape
    per_channel_dim = weights.shape[0]
    freq_dim = input_dim * per_channel_dim
    out_dim = input_dim + 2 * freq_dim

    tile = _round_up(max(int(tile_rows), 8), 8)
    tile = min(tile, _round_up(pl.cdiv(n_rows, 2), 8))      # v7x: >= 2 blocks
    grid_rows = pl.cdiv(n_rows, tile)

    w_row = (2.0 * jnp.pi) * jnp.tile(
        weights.astype(jnp.float32), (input_dim,)).reshape(1, freq_dim)

    kernel = functools.partial(
        _fourier_fl_kernel, input_dim=input_dim,
        per_channel_dim=per_channel_dim)

    return pl.pallas_call(
        kernel,
        out_shape=jax.ShapeDtypeStruct((n_rows, out_dim), out_dtype),
        grid_spec=pltpu.PrefetchScalarGridSpec(
            num_scalar_prefetch=0,
            grid=(grid_rows,),
            in_specs=[
                pl.BlockSpec((tile, input_dim), lambda i: (i, 0)),
                pl.BlockSpec((1, freq_dim), lambda i: (0, 0)),
            ],
            out_specs=pl.BlockSpec((tile, out_dim), lambda i: (i, 0)),
        ),
        compiler_params=pltpu.CompilerParams(
            dimension_semantics=("parallel",),
        ),
    )(x2d, w_row)


# -----------------------------------------------------------------------------
# Public wrapper.
# -----------------------------------------------------------------------------
def learned_fourier_embedder(x, weights, *, tile_rows=4096, out_dtype=None,
                             lane_dense=True):
    """Pallas TPU forward pass of LearnedFourierEmbedder.

    x: (..., input_dim); weights: (per_channel_dim,).
    Returns (..., input_dim * (2*per_channel_dim + 1)) in out_dtype (default
    x.dtype; pass jnp.bfloat16 on write-bound v5e/v6e if the consumer allows).
    """
    *lead, input_dim = x.shape
    per_channel_dim = weights.shape[0]
    out_dim = input_dim * (2 * per_channel_dim + 1)
    out_dtype = x.dtype if out_dtype is None else out_dtype

    n_rows = math.prod(lead)
    x2d = x.reshape(n_rows, input_dim)

    if lane_dense:
        try:
            out2d = _embed_lane_dense(x2d, weights, tile_rows=tile_rows,
                                      out_dtype=out_dtype)
            return out2d.reshape(*lead, out_dim)
        except Exception:
            # TODO(synk): drop this fallback once the target Mosaic release is
            # confirmed to lower the (pad_rows, tile) f32 block transpose.
            # (The fallback only triggers in eager mode; under an outer
            # jax.jit a lowering error would surface at jit-compile time.)
            pass
    out2d = _embed_feature_last(x2d, weights, tile_rows=tile_rows,
                                out_dtype=out_dtype)
    return out2d.reshape(*lead, out_dim)


def reference(x, weights):
    freqs = (x[..., None] * weights[None] * 2.0 * jnp.pi).reshape(
        *x.shape[:-1], -1)
    return jnp.concatenate([x, jnp.sin(freqs), jnp.cos(freqs)], axis=-1)


if __name__ == "__main__":
    # Module config: input_dim=3 (e.g. xyz points), dim=48 -> per_channel_dim=8.
    input_dim = 3
    dim = 48
    per_channel_dim = (dim // 2) // input_dim              # 8
    out_dim = input_dim * (2 * per_channel_dim + 1)        # 51

    key = jax.random.PRNGKey(0)
    k1, k2, k3 = jax.random.split(key, 3)
    weights = jax.random.normal(k3, (per_channel_dim,), dtype=jnp.float32)

    # 1) Lane-dense default path, single exact 128-row block.
    x = jax.random.normal(k1, (2, 64, input_dim), dtype=jnp.float32)
    out = jax.block_until_ready(learned_fourier_embedder(x, weights))
    assert out.shape == (2, 64, out_dim), out.shape
    ref = reference(x, weights)
    err = float(jnp.max(jnp.abs(out - ref)))
    assert jnp.allclose(out, ref, atol=5e-5, rtol=1e-5), err

    # 2) Multi-block path with a ragged last block (400 rows -> 256-row tiles,
    #    exercising the no-pad / exact-out-shape design and the >=2-block
    #    parallel axis).
    xr = jax.random.normal(k2, (2, 200, input_dim), dtype=jnp.float32)
    refr = reference(xr, weights)
    outr = jax.block_until_ready(learned_fourier_embedder(xr, weights))
    assert outr.shape == (2, 200, out_dim), outr.shape
    err_r = float(jnp.max(jnp.abs(outr - refr)))
    assert jnp.allclose(outr, refr, atol=5e-5, rtol=1e-5), err_r

    # 3) Feature-last fallback kernel (used when the transpose path is
    #    unavailable), validated explicitly including a ragged last block.
    outf = jax.block_until_ready(
        learned_fourier_embedder(xr, weights, tile_rows=48, lane_dense=False))
    err_f = float(jnp.max(jnp.abs(outf - refr)))
    assert jnp.allclose(outf, refr, atol=5e-5, rtol=1e-5), err_f

    print("KERNEL_OK")
</pallas_src>

<mosaic_0001>
module attributes {stable_mosaic.version = 11 : i64} {
  func.func @_fourier_cf_kernel(%arg0: i32, %arg1: memref<3x128xf32, #tpu.memory_space<vmem>>, %arg2: memref<24x1xf32, #tpu.memory_space<vmem>>, %arg3: memref<128x51xf32, #tpu.memory_space<vmem>>) attributes {dimension_semantics = [#tpu.dimension_semantics<parallel>], iteration_bounds = array<i64: 1>, scalar_prefetch = 0 : i64, scratch_operands = 0 : i64, tpu.core_type = #tpu.core_type<tc>, window_params = [{transform_indices = @transform_0, window_bounds = array<i64: 3, 128>}, {pipeline_mode = #tpu.pipeline_mode<synchronous>, transform_indices = @transform_1, window_bounds = array<i64: 24, 1>}, {transform_indices = @transform_2, window_bounds = array<i64: 128, 51>}]} {
    %c0 = arith.constant 0 : index
    %c0_0 = arith.constant 0 : index
    %0 = vector.load %arg1[%c0, %c0_0] : memref<3x128xf32, #tpu.memory_space<vmem>>, vector<3x128xf32>
    %1 = vector.extract_strided_slice %0 {offsets = [0, 0], sizes = [1, 128], strides = [1, 1]} : vector<3x128xf32> to vector<1x128xf32>
    %2 = vector.shape_cast %1 : vector<1x128xf32> to vector<1x128xf32>
    %3 = vector.broadcast %2 : vector<1x128xf32> to vector<8x128xf32>
    %4 = vector.extract_strided_slice %0 {offsets = [1, 0], sizes = [1, 128], strides = [1, 1]} : vector<3x128xf32> to vector<1x128xf32>
    %5 = vector.shape_cast %4 : vector<1x128xf32> to vector<1x128xf32>
    %6 = vector.broadcast %5 : vector<1x128xf32> to vector<8x128xf32>
    %7 = vector.extract_strided_slice %0 {offsets = [2, 0], sizes = [1, 128], strides = [1, 1]} : vector<3x128xf32> to vector<1x128xf32>
    %8 = vector.shape_cast %7 : vector<1x128xf32> to vector<1x128xf32>
    %9 = vector.broadcast %8 : vector<1x128xf32> to vector<8x128xf32>
    %10 = tpu.concatenate %3, %6, %9 in 0 : vector<8x128xf32>, vector<8x128xf32>, vector<8x128xf32> -> vector<24x128xf32>
    %c0_1 = arith.constant 0 : index
    %c0_2 = arith.constant 0 : index
    %11 = vector.load %arg2[%c0_1, %c0_2] : memref<24x1xf32, #tpu.memory_space<vmem>>, vector<24x1xf32>
    %12 = vector.broadcast %11 : vector<24x1xf32> to vector<24x128xf32>
    %13 = arith.mulf %10, %12 : vector<24x128xf32>
    %14 = math.sin %13 : vector<24x128xf32>
    %15 = math.cos %13 : vector<24x128xf32>
    %cst = arith.constant 0.000000e+00 : f32
    %16 = vector.broadcast %cst : f32 to vector<5x128xf32>
    %17 = tpu.concatenate %0, %14, %15, %16 in 0 : vector<3x128xf32>, vector<24x128xf32>, vector<24x128xf32>, vector<5x128xf32> -> vector<56x128xf32>
    %18 = tpu.transpose %17, [1, 0] : vector<56x128xf32> -> vector<128x56xf32>
    %19 = vector.extract_strided_slice %18 {offsets = [0, 0], sizes = [128, 51], strides = [1, 1]} : vector<128x56xf32> to vector<128x51xf32>
    %c0_3 = arith.constant 0 : index
    %c0_4 = arith.constant 0 : index
    %20 = vector.load %arg3[%c0_3, %c0_4] : memref<128x51xf32, #tpu.memory_space<vmem>>, vector<128x51xf32>
    tpu.vector_store %arg3[%c0_3, %c0_4], %19 {strides = array<i32>} : memref<128x51xf32, #tpu.memory_space<vmem>>, vector<128x51xf32>,
    return
  }
  func.func @transform_0(%arg0: i32) -> (i32, i32) {
    %c0_i32 = arith.constant 0 : i32
    %c0_i32_0 = arith.constant 0 : i32
    return %c0_i32, %arg0 : i32, i32
  }
  func.func @transform_1(%arg0: i32) -> (i32, i32) {
    %c0_i32 = arith.constant 0 : i32
    %c0_i32_0 = arith.constant 0 : i32
    %c0_i32_1 = arith.constant 0 : i32
    return %c0_i32, %c0_i32_0 : i32, i32
  }
  func.func @transform_2(%arg0: i32) -> (i32, i32) {
    %c0_i32 = arith.constant 0 : i32
    %c0_i32_0 = arith.constant 0 : i32
    return %arg0, %c0_i32 : i32, i32
  }
}

module attributes {stable_mosaic.version = 11 : i64} {
  func.func @_fourier_fl_kernel(%arg0: i32, %arg1: memref<64x3xf32, #tpu.memory_space<vmem>>, %arg2: memref<1x24xf32, #tpu.memory_space<vmem>>, %arg3: memref<64x51xf32, #tpu.memory_space<vmem>>) attributes {dimension_semantics = [#tpu.dimension_semantics<parallel>], iteration_bounds = array<i64: 2>, scalar_prefetch = 0 : i64, scratch_operands = 0 : i64, tpu.core_type = #tpu.core_type<tc>, window_params = [{transform_indices = @transform_0, window_bounds = array<i64: 64, 3>}, {pipeline_mode = #tpu.pipeline_mode<synchronous>, transform_indices = @transform_1, window_bounds = array<i64: 1, 24>}, {transform_indices = @transform_2, window_bounds = array<i64: 64, 51>}]} {
    %c0 = arith.constant 0 : index
    %c0_0 = arith.constant 0 : index
    %0 = vector.load %arg1[%c0, %c0_0] : memref<64x3xf32, #tpu.memory_space<vmem>>, vector<64x3xf32>
    %1 = vector.extract_strided_slice %0 {offsets = [0, 0], sizes = [64, 1], strides = [1, 1]} : vector<64x3xf32> to vector<64x1xf32>
    %2 = vector.shape_cast %1 : vector<64x1xf32> to vector<64x1xf32>
    %3 = vector.broadcast %2 : vector<64x1xf32> to vector<64x8xf32>
    %4 = vector.extract_strided_slice %0 {offsets = [0, 1], sizes = [64, 1], strides = [1, 1]} : vector<64x3xf32> to vector<64x1xf32>
    %5 = vector.shape_cast %4 : vector<64x1xf32> to vector<64x1xf32>
    %6 = vector.broadcast %5 : vector<64x1xf32> to vector<64x8xf32>
    %7 = vector.extract_strided_slice %0 {offsets = [0, 2], sizes = [64, 1], strides = [1, 1]} : vector<64x3xf32> to vector<64x1xf32>
    %8 = vector.shape_cast %7 : vector<64x1xf32> to vector<64x1xf32>
    %9 = vector.broadcast %8 : vector<64x1xf32> to vector<64x8xf32>
    %10 = tpu.concatenate %3, %6, %9 in 1 : vector<64x8xf32>, vector<64x8xf32>, vector<64x8xf32> -> vector<64x24xf32>
    %c0_1 = arith.constant 0 : index
    %c0_2 = arith.constant 0 : index
    %11 = vector.load %arg2[%c0_1, %c0_2] : memref<1x24xf32, #tpu.memory_space<vmem>>, vector<1x24xf32>
    %12 = vector.broadcast %11 : vector<1x24xf32> to vector<64x24xf32>
    %13 = arith.mulf %10, %12 : vector<64x24xf32>
    %14 = math.sin %13 : vector<64x24xf32>
    %15 = math.cos %13 : vector<64x24xf32>
    %16 = tpu.concatenate %0, %14, %15 in 1 : vector<64x3xf32>, vector<64x24xf32>, vector<64x24xf32> -> vector<64x51xf32>
    %c0_3 = arith.constant 0 : index
    %c0_4 = arith.constant 0 : index
    %17 = vector.load %arg3[%c0_3, %c0_4] : memref<64x51xf32, #tpu.memory_space<vmem>>, vector<64x51xf32>
    tpu.vector_store %arg3[%c0_3, %c0_4], %16 {strides = array<i32>} : memref<64x51xf32, #tpu.memory_space<vmem>>, vector<64x51xf32>,
    return
  }
  func.func @transform_0(%arg0: i32) -> (i32, i32) {
    %c0_i32 = arith.constant 0 : i32
    %c0_i32_0 = arith.constant 0 : i32
    return %arg0, %c0_i32 : i32, i32
  }
  func.func @transform_1(%arg0: i32) -> (i32, i32) {
    %c0_i32 = arith.constant 0 : i32
    %c0_i32_0 = arith.constant 0 : i32
    %c0_i32_1 = arith.constant 0 : i32
    return %c0_i32, %c0_i32_0 : i32, i32
  }
  func.func @transform_2(%arg0: i32) -> (i32, i32) {
    %c0_i32 = arith.constant 0 : i32
    %c0_i32_0 = arith.constant 0 : i32
    return %arg0, %c0_i32 : i32, i32
  }
}

</mosaic_0001>

<llo_original>
// kernel: tpu_custom_call.1
$region0: #{tpu_custom_call.1}
  #allocation0 [shape = 'u32[]', space=smem, size = 0x4, offset = 0x4, fixed_abs, tag = 'smem constant byte address 0x4 - core index']
  #allocation1 [shape = 'u32[144,128]{1,0:T(1,128)}', space=vmem, size = 0x12000, scoped, tag = 'internal scratch']
  %s0 = inlined_call_operand.vmem [shape: f32[3,128], index: 0, kind: input, shape index: {}]
  %s1 = inlined_call_operand.vmem [shape: f32[24,1], index: 1, kind: input, shape index: {}]
  %s2 = inlined_call_operand.vmem [shape: f32[128,51], index: 2, kind: output, shape index: {}]
  %s3 = sld [smem:[#allocation0]]
  $region18: #{tpu_custom_call.1} parent=0
    _
  %s5 = ssub.s32 1, %s3
  %s6 = scalar_select 0, %s5, %s3
  // Predicated region
  $region2: #{tpu_custom_call.1} parent=0 // pred_check
    _
  $region3: #{tpu_custom_call.1} parent=0 // pred_check_branch
    %8 = sbr.rel (0) target = $region5
  $region4: #{tpu_custom_call.1} parent=0 // pred_region
    _
  $region5: #{tpu_custom_call.1} parent=0 // pred_fallthru
    _
  // Predicated region
  $region6: #{tpu_custom_call.1} parent=0 // pred_check
    _
  $region7: #{tpu_custom_call.1} parent=0 // pred_check_branch
    %10 = sbr.rel (0) target = $region9
  $region8: #{tpu_custom_call.1} parent=0 // pred_region
    _
  $region9: #{tpu_custom_call.1} parent=0 // pred_fallthru
    _
  %v11 = vld [vmem:[%s0] sm:$0x7]
  %v12 = vlaneseq
  %v13 = vshrl.u32 %v12, 7
  %v14 = vsub.s32 0, %v13
  %v15 = vrot.slane %v11, %v14
  %v16 = vlaneseq
  %v17 = vshrl.u32 %v16, 7
  %v18 = vsub.s32 1, %v17
  %v19 = vrot.slane %v11, %v18
  %v20 = vlaneseq
  %v21 = vshrl.u32 %v20, 7
  %v22 = vsub.s32 2, %v21
  %v23 = vrot.slane %v11, %v22
  %v24 = vld [vmem:[%s1] sm:$0xff]
  %v25 = vld [vmem:[%s1 + $0x8] sm:$0xff]
  %v26 = vld [vmem:[%s1 + $0x10] sm:$0xff]
  %28 = vset.pattern.permute.xlu0 0
  %29 = vperm.xlu0 %28, %v24
  %v30 = vpop.permute.xlu0 %29
  %33 = vset.pattern.permute.xlu0 0
  %34 = vperm.xlu0 %33, %v25
  %v35 = vpop.permute.xlu0 %34
  %38 = vset.pattern.permute.xlu0 0
  %39 = vperm.xlu0 %38, %v26
  %v40 = vpop.permute.xlu0 %39
  %v42 = vmul.f32 %v15, %v30
  %v43 = vmul.f32 %v19, %v35
  %v44 = vmul.f32 %v23, %v40
  %v45 = vand.u32 2147483647, %v42
  %vm46 = vcmp.le.f32.partialorder %v45, 0.7853982
  %vm47 = vcmp.lt.s32.totalorder %v42, 0
  %v48 = vand.u32 %v42, 2139095040
  %v49 = vshrl.u32 %v48, 23
  %v50 = vsub.s32 %v49, 127
  %v51 = vand.u32 2147483647, %v42
  %v52 = vand.u32 %v51, 8388607
  %v53 = vor.u32 %v52, 8388608
  %v54 = vsub.s32 0, %v53
  %v55 = vadd.s32 %v50, 1
  %vm56 = vcmp.gt.s32.totalorder %v55, 0
  %v57 = vsel %vm56, %v55, 0
  %v58 = vshrl.u32 %v57, 5
  %v59 = vand.u32 %v57, 31
  %v60 = vsub.s32 32, %v59
  %v61 = vshrl.u32 683565275, %v60
  %v62 = vshll.u32 683565275, %v59
  %v63 = vshrl.u32 2475754826, %v60
  %v64 = vor.u32 %v62, %v63
  %v65 = vshll.u32 2475754826, %v59
  %v66 = vshrl.u32 2131351028, %v60
  %v67 = vor.u32 %v65, %v66
  %v68 = vshll.u32 2131351028, %v59
  %v69 = vshrl.u32 2102212464, %v60
  %v70 = vor.u32 %v68, %v69
  %v71 = vshll.u32 2102212464, %v59
  %v72 = vshrl.u32 920167782, %v60
  %v73 = vor.u32 %v71, %v72
  %v74 = vshll.u32 920167782, %v59
  %v75 = vshrl.u32 1326507024, %v60
  %v76 = vor.u32 %v74, %v75
  %vm77 = vcmp.lt.s32.totalorder %v58, 1
  %vm78 = vcmp.lt.s32.totalorder %v58, 2
  %vm79 = vcmp.lt.s32.totalorder %v58, 3
  %vm80 = vcmp.lt.s32.totalorder %v58, 4
  %v81 = vsel %vm77, %v61, %v64
  %v82 = vsel %vm80, %v70, 2102212464
  %v83 = vsel %vm79, %v67, %v82
  %v84 = vsel %vm78, %v81, %v83
  %v85 = vsel %vm77, %v64, %v67
  %v86 = vsel %vm80, %v73, 920167782
  %v87 = vsel %vm79, %v70, %v86
  %v88 = vsel %vm78, %v85, %v87
  %v89 = vsel %vm77, %v67, %v70
  %v90 = vsel %vm80, %v76, 1326507024
  %v91 = vsel %vm79, %v73, %v90
  %v92 = vsel %vm78, %v89, %v91
  %v93 = vshll.u32 %v53, 8
  %v94 = vmul.u32.u64.compose %v93, %v92
  %v95 = vextract.low.u32 %v94
  %v96 = vextract.high.u32 %v94
  %v97 = vmul.u32.u64.compose %v93, %v88
  %v98 = vextract.low.u32 %v97
  %v99 = vextract.high.u32 %v97
  %v100 = vmul.u32 %v93, %v84
  %v101 = vadd.s32 %v96, %v98
  %vm102 = vc.u32 %v96, %v98
  %v103 = vadd.s32 %v99, 1
  %v104 = vsel %vm102, %v103, %v99
  %v105 = vadd.s32 %v100, %v104
  %v106 = vadd.s32 %v105, 536870912
  %v107 = vshrl.u32 %v106, 30
  %v108 = vshll.u32 %v107, 30
  %v109 = vsub.s32 %v105, %v108
  %vm110 = vcmp.lt.s32.totalorder %v109, 0
  %v111 = vsub.s32 0, %v109
  %v112 = vsel %vm110, %v111, %v109
  %v113 = vclz %v112
  %v114 = vsub.s32 %v113, 2
  %vm115 = vcmp.gt.s32.totalorder 0, %v114
  %v116 = vsel %vm115, 0, %v114
  %v117 = vsub.s32 32, %v116
  %v118 = vshll.u32 %v109, %v116
  %v119 = vshrl.u32 %v101, %v117
  %v120 = vor.u32 %v118, %v119
  %v121 = vsub.s32 4294967266, %v116
  %v122 = vadd.s32 %v121, 127
  %v123 = vshll.u32 %v122, 23
  %v124 = vor.u32 4788187, %v123
  %v125 = vand.u32 2147483647, %v124
  %v127 = vcvt.s32.f32 %v120
  %v128 = vmul.f32 %v127, %v125
  %v129 = vxor.u32 %v128, 2147483648
  %v130 = vsel %vm47, %v129, %v128
  %v131 = vsub.s32 4, %v107
  %v132 = vsel %vm47, %v131, %v107
  %v133 = vsel %vm46, %v42, %v130
  %v134 = vsel %vm46, 0, %v132
  %v135 = vcosq.f32.pop %v133
  %v136 = vsinq.f32.pop %v133
  %vm137 = vweird.f32 %v42
  %v138 = vadd.s32 %v134, 3
  %v139 = vand.u32 %v138, 3
  %vm140 = vcmp.lt.s32.totalorder %v139, 2
  %vm141 = vcmp.eq.s32.totalorder %v139, 0
  %v142 = vxor.u32 %v136, 2147483648
  %v143 = vsel %vm141, %v135, %v142
  %vm144 = vcmp.eq.s32.totalorder %v139, 2
  %v145 = vxor.u32 %v135, 2147483648
  %v146 = vsel %vm144, %v145, %v136
  %v147 = vsel %vm140, %v143, %v146
  %v148 = vsel %vm137, nan, %v147
  %v149 = vand.u32 2147483647, %v43
  %vm150 = vcmp.le.f32.partialorder %v149, 0.7853982
  %vm151 = vcmp.lt.s32.totalorder %v43, 0
  %v152 = vand.u32 %v43, 2139095040
  %v153 = vshrl.u32 %v152, 23
  %v154 = vsub.s32 %v153, 127
  %v155 = vand.u32 2147483647, %v43
  %v156 = vand.u32 %v155, 8388607
  %v157 = vor.u32 %v156, 8388608
  %v158 = vsub.s32 0, %v157
  %v159 = vadd.s32 %v154, 1
  %vm160 = vcmp.gt.s32.totalorder %v159, 0
  %v161 = vsel %vm160, %v159, 0
  %v162 = vshrl.u32 %v161, 5
  %v163 = vand.u32 %v161, 31
  %v164 = vsub.s32 32, %v163
  %v165 = vshrl.u32 683565275, %v164
  %v166 = vshll.u32 683565275, %v163
  %v167 = vshrl.u32 2475754826, %v164
  %v168 = vor.u32 %v166, %v167
  %v169 = vshll.u32 2475754826, %v163
  %v170 = vshrl.u32 2131351028, %v164
  %v171 = vor.u32 %v169, %v170
  %v172 = vshll.u32 2131351028, %v163
  %v173 = vshrl.u32 2102212464, %v164
  %v174 = vor.u32 %v172, %v173
  %v175 = vshll.u32 2102212464, %v163
  %v176 = vshrl.u32 920167782, %v164
  %v177 = vor.u32 %v175, %v176
  %v178 = vshll.u32 920167782, %v163
  %v179 = vshrl.u32 1326507024, %v164
  %v180 = vor.u32 %v178, %v179
  %vm181 = vcmp.lt.s32.totalorder %v162, 1
  %vm182 = vcmp.lt.s32.totalorder %v162, 2
  %vm183 = vcmp.lt.s32.totalorder %v162, 3
  %vm184 = vcmp.lt.s32.totalorder %v162, 4
  %v185 = vsel %vm181, %v165, %v168
  %v186 = vsel %vm184, %v174, 2102212464
  %v187 = vsel %vm183, %v171, %v186
  %v188 = vsel %vm182, %v185, %v187
  %v189 = vsel %vm181, %v168, %v171
  %v190 = vsel %vm184, %v177, 920167782
  %v191 = vsel %vm183, %v174, %v190
  %v192 = vsel %vm182, %v189, %v191
  %v193 = vsel %vm181, %v171, %v174
  %v194 = vsel %vm184, %v180, 1326507024
  %v195 = vsel %vm183, %v177, %v194
  %v196 = vsel %vm182, %v193, %v195
  %v197 = vshll.u32 %v157, 8
  %v198 = vmul.u32.u64.compose %v197, %v196
  %v199 = vextract.low.u32 %v198
  %v200 = vextract.high.u32 %v198
  %v201 = vmul.u32.u64.compose %v197, %v192
  %v202 = vextract.low.u32 %v201
  %v203 = vextract.high.u32 %v201
  %v204 = vmul.u32 %v197, %v188
  %v205 = vadd.s32 %v200, %v202
  %vm206 = vc.u32 %v200, %v202
  %v207 = vadd.s32 %v203, 1
  %v208 = vsel %vm206, %v207, %v203
  %v209 = vadd.s32 %v204, %v208
  %v210 = vadd.s32 %v209, 536870912
  %v211 = vshrl.u32 %v210, 30
  %v212 = vshll.u32 %v211, 30
  %v213 = vsub.s32 %v209, %v212
  %vm214 = vcmp.lt.s32.totalorder %v213, 0
  %v215 = vsub.s32 0, %v213
  %v216 = vsel %vm214, %v215, %v213
  %v217 = vclz %v216
  %v218 = vsub.s32 %v217, 2
  %vm219 = vcmp.gt.s32.totalorder 0, %v218
  %v220 = vsel %vm219, 0, %v218
  %v221 = vsub.s32 32, %v220
  %v222 = vshll.u32 %v213, %v220
  %v223 = vshrl.u32 %v205, %v221
  %v224 = vor.u32 %v222, %v223
  %v225 = vsub.s32 4294967266, %v220
  %v226 = vadd.s32 %v225, 127
  %v227 = vshll.u32 %v226, 23
  %v228 = vor.u32 4788187, %v227
  %v229 = vand.u32 2147483647, %v228
  %v231 = vcvt.s32.f32 %v224
  %v232 = vmul.f32 %v231, %v229
  %v233 = vxor.u32 %v232, 2147483648
  %v234 = vsel %vm151, %v233, %v232
  %v235 = vsub.s32 4, %v211
  %v236 = vsel %vm151, %v235, %v211
  %v237 = vsel %vm150, %v43, %v234
  %v238 = vsel %vm150, 0, %v236
  %v239 = vcosq.f32.pop %v237
  %v240 = vsinq.f32.pop %v237
  %vm241 = vweird.f32 %v43
  %v242 = vadd.s32 %v238, 3
  %v243 = vand.u32 %v242, 3
  %vm244 = vcmp.lt.s32.totalorder %v243, 2
  %vm245 = vcmp.eq.s32.totalorder %v243, 0
  %v246 = vxor.u32 %v240, 2147483648
  %v247 = vsel %vm245, %v239, %v246
  %vm248 = vcmp.eq.s32.totalorder %v243, 2
  %v249 = vxor.u32 %v239, 2147483648
  %v250 = vsel %vm248, %v249, %v240
  %v251 = vsel %vm244, %v247, %v250
  %v252 = vsel %vm241, nan, %v251
  %v253 = vand.u32 2147483647, %v44
  %vm254 = vcmp.le.f32.partialorder %v253, 0.7853982
  %vm255 = vcmp.lt.s32.totalorder %v44, 0
  %v256 = vand.u32 %v44, 2139095040
  %v257 = vshrl.u32 %v256, 23
  %v258 = vsub.s32 %v257, 127
  %v259 = vand.u32 2147483647, %v44
  %v260 = vand.u32 %v259, 8388607
  %v261 = vor.u32 %v260, 8388608
  %v262 = vsub.s32 0, %v261
  %v263 = vadd.s32 %v258, 1
  %vm264 = vcmp.gt.s32.totalorder %v263, 0
  %v265 = vsel %vm264, %v263, 0
  %v266 = vshrl.u32 %v265, 5
  %v267 = vand.u32 %v265, 31
  %v268 = vsub.s32 32, %v267
  %v269 = vshrl.u32 683565275, %v268
  %v270 = vshll.u32 683565275, %v267
  %v271 = vshrl.u32 2475754826, %v268
  %v272 = vor.u32 %v270, %v271
  %v273 = vshll.u32 2475754826, %v267
  %v274 = vshrl.u32 2131351028, %v268
  %v275 = vor.u32 %v273, %v274
  %v276 = vshll.u32 2131351028, %v267
  %v277 = vshrl.u32 2102212464, %v268
  %v278 = vor.u32 %v276, %v277
  %v279 = vshll.u32 2102212464, %v267
  %v280 = vshrl.u32 920167782, %v268
  %v281 = vor.u32 %v279, %v280
  %v282 = vshll.u32 920167782, %v267
  %v283 = vshrl.u32 1326507024, %v268
  %v284 = vor.u32 %v282, %v283
  %vm285 = vcmp.lt.s32.totalorder %v266, 1
  %vm286 = vcmp.lt.s32.totalorder %v266, 2
  %vm287 = vcmp.lt.s32.totalorder %v266, 3
  %vm288 = vcmp.lt.s32.totalorder %v266, 4
  %v289 = vsel %vm285, %v269, %v272
  %v290 = vsel %vm288, %v278, 2102212464
  %v291 = vsel %vm287, %v275, %v290
  %v292 = vsel %vm286, %v289, %v291
  %v293 = vsel %vm285, %v272, %v275
  %v294 = vsel %vm288, %v281, 920167782
  %v295 = vsel %vm287, %v278, %v294
  %v296 = vsel %vm286, %v293, %v295
  %v297 = vsel %vm285, %v275, %v278
  %v298 = vsel %vm288, %v284, 1326507024
  %v299 = vsel %vm287, %v281, %v298
  %v300 = vsel %vm286, %v297, %v299
  %v301 = vshll.u32 %v261, 8
  %v302 = vmul.u32.u64.compose %v301, %v300
  %v303 = vextract.low.u32 %v302
  %v304 = vextract.high.u32 %v302
  %v305 = vmul.u32.u64.compose %v301, %v296
  %v306 = vextract.low.u32 %v305
  %v307 = vextract.high.u32 %v305
  %v308 = vmul.u32 %v301, %v292
  %v309 = vadd.s32 %v304, %v306
  %vm310 = vc.u32 %v304, %v306
  %v311 = vadd.s32 %v307, 1
  %v312 = vsel %vm310, %v311, %v307
  %v313 = vadd.s32 %v308, %v312
  %v314 = vadd.s32 %v313, 536870912
  %v315 = vshrl.u32 %v314, 30
  %v316 = vshll.u32 %v315, 30
  %v317 = vsub.s32 %v313, %v316
  %vm318 = vcmp.lt.s32.totalorder %v317, 0
  %v319 = vsub.s32 0, %v317
  %v320 = vsel %vm318, %v319, %v317
  %v321 = vclz %v320
  %v322 = vsub.s32 %v321, 2
  %vm323 = vcmp.gt.s32.totalorder 0, %v322
  %v324 = vsel %vm323, 0, %v322
  %v325 = vsub.s32 32, %v324
  %v326 = vshll.u32 %v317, %v324
  %v327 = vshrl.u32 %v309, %v325
  %v328 = vor.u32 %v326, %v327
  %v329 = vsub.s32 4294967266, %v324
  %v330 = vadd.s32 %v329, 127
  %v331 = vshll.u32 %v330, 23
  %v332 = vor.u32 4788187, %v331
  %v333 = vand.u32 2147483647, %v332
  %v335 = vcvt.s32.f32 %v328
  %v336 = vmul.f32 %v335, %v333
  %v337 = vxor.u32 %v336, 2147483648
  %v338 = vsel %vm255, %v337, %v336
  %v339 = vsub.s32 4, %v315
  %v340 = vsel %vm255, %v339, %v315
  %v341 = vsel %vm254, %v44, %v338
  %v342 = vsel %vm254, 0, %v340
  %v343 = vcosq.f32.pop %v341
  %v344 = vsinq.f32.pop %v341
  %vm345 = vweird.f32 %v44
  %v346 = vadd.s32 %v342, 3
  %v347 = vand.u32 %v346, 3
  %vm348 = vcmp.lt.s32.totalorder %v347, 2
  %vm349 = vcmp.eq.s32.totalorder %v347, 0
  %v350 = vxor.u32 %v344, 2147483648
  %v351 = vsel %vm349, %v343, %v350
  %vm352 = vcmp.eq.s32.totalorder %v347, 2
  %v353 = vxor.u32 %v343, 2147483648
  %v354 = vsel %vm352, %v353, %v344
  %v355 = vsel %vm348, %v351, %v354
  %v356 = vsel %vm345, nan, %v355
  %v357 = vand.u32 2147483647, %v42
  %vm358 = vcmp.le.f32.partialorder %v357, 0.7853982
  %vm359 = vcmp.lt.s32.totalorder %v42, 0
  %v360 = vand.u32 %v42, 2139095040
  %v361 = vshrl.u32 %v360, 23
  %v362 = vsub.s32 %v361, 127
  %v363 = vand.u32 2147483647, %v42
  %v364 = vand.u32 %v363, 8388607
  %v365 = vor.u32 %v364, 8388608
  %v366 = vsub.s32 0, %v365
  %v367 = vadd.s32 %v362, 1
  %vm368 = vcmp.gt.s32.totalorder %v367, 0
  %v369 = vsel %vm368, %v367, 0
  %v370 = vshrl.u32 %v369, 5
  %v371 = vand.u32 %v369, 31
  %v372 = vsub.s32 32, %v371
  %v373 = vshrl.u32 683565275, %v372
  %v374 = vshll.u32 683565275, %v371
  %v375 = vshrl.u32 2475754826, %v372
  %v376 = vor.u32 %v374, %v375
  %v377 = vshll.u32 2475754826, %v371
  %v378 = vshrl.u32 2131351028, %v372
  %v379 = vor.u32 %v377, %v378
  %v380 = vshll.u32 2131351028, %v371
  %v381 = vshrl.u32 2102212464, %v372
  %v382 = vor.u32 %v380, %v381
  %v383 = vshll.u32 2102212464, %v371
  %v384 = vshrl.u32 920167782, %v372
  %v385 = vor.u32 %v383, %v384
  %v386 = vshll.u32 920167782, %v371
  %v387 = vshrl.u32 1326507024, %v372
  %v388 = vor.u32 %v386, %v387
  %vm389 = vcmp.lt.s32.totalorder %v370, 1
  %vm390 = vcmp.lt.s32.totalorder %v370, 2
  %vm391 = vcmp.lt.s32.totalorder %v370, 3
  %vm392 = vcmp.lt.s32.totalorder %v370, 4
  %v393 = vsel %vm389, %v373, %v376
  %v394 = vsel %vm392, %v382, 2102212464
  %v395 = vsel %vm391, %v379, %v394
  %v396 = vsel %vm390, %v393, %v395
  %v397 = vsel %vm389, %v376, %v379
  %v398 = vsel %vm392, %v385, 920167782
  %v399 = vsel %vm391, %v382, %v398
  %v400 = vsel %vm390, %v397, %v399
  %v401 = vsel %vm389, %v379, %v382
  %v402 = vsel %vm392, %v388, 1326507024
  %v403 = vsel %vm391, %v385, %v402
  %v404 = vsel %vm390, %v401, %v403
  %v405 = vshll.u32 %v365, 8
  %v406 = vmul.u32.u64.compose %v405, %v404
  %v407 = vextract.low.u32 %v406
  %v408 = vextract.high.u32 %v406
  %v409 = vmul.u32.u64.compose %v405, %v400
  %v410 = vextract.low.u32 %v409
  %v411 = vextract.high.u32 %v409
  %v412 = vmul.u32 %v405, %v396
  %v413 = vadd.s32 %v408, %v410
  %vm414 = vc.u32 %v408, %v410
  %v415 = vadd.s32 %v411, 1
  %v416 = vsel %vm414, %v415, %v411
  %v417 = vadd.s32 %v412, %v416
  %v418 = vadd.s32 %v417, 536870912
  %v419 = vshrl.u32 %v418, 30
  %v420 = vshll.u32 %v419, 30
  %v421 = vsub.s32 %v417, %v420
  %vm422 = vcmp.lt.s32.totalorder %v421, 0
  %v423 = vsub.s32 0, %v421
  %v424 = vsel %vm422, %v423, %v421
  %v425 = vclz %v424
  %v426 = vsub.s32 %v425, 2
  %vm427 = vcmp.gt.s32.totalorder 0, %v426
  %v428 = vsel %vm427, 0, %v426
  %v429 = vsub.s32 32, %v428
  %v430 = vshll.u32 %v421, %v428
  %v431 = vshrl.u32 %v413, %v429
  %v432 = vor.u32 %v430, %v431
  %v433 = vsub.s32 4294967266, %v428
  %v434 = vadd.s32 %v433, 127
  %v435 = vshll.u32 %v434, 23
  %v436 = vor.u32 4788187, %v435
  %v437 = vand.u32 2147483647, %v436
  %v439 = vcvt.s32.f32 %v432
  %v440 = vmul.f32 %v439, %v437
  %v441 = vxor.u32 %v440, 2147483648
  %v442 = vsel %vm359, %v441, %v440
  %v443 = vsub.s32 4, %v419
  %v444 = vsel %vm359, %v443, %v419
  %v445 = vsel %vm358, %v42, %v442
  %v446 = vsel %vm358, 0, %v444
  %v447 = vcosq.f32.pop %v445
  %v448 = vsinq.f32.pop %v445
  %vm449 = vweird.f32 %v42
  %v450 = vand.u32 %v446, 3
  %vm451 = vcmp.lt.s32.totalorder %v450, 2
  %vm452 = vcmp.eq.s32.totalorder %v450, 0
  %v453 = vxor.u32 %v448, 2147483648
  %v454 = vsel %vm452, %v447, %v453
  %vm455 = vcmp.eq.s32.totalorder %v450, 2
  %v456 = vxor.u32 %v447, 2147483648
  %v457 = vsel %vm455, %v456, %v448
  %v458 = vsel %vm451, %v454, %v457
  %v459 = vsel %vm449, nan, %v458
  %v460 = vand.u32 2147483647, %v43
  %vm461 = vcmp.le.f32.partialorder %v460, 0.7853982
  %vm462 = vcmp.lt.s32.totalorder %v43, 0
  %v463 = vand.u32 %v43, 2139095040
  %v464 = vshrl.u32 %v463, 23
  %v465 = vsub.s32 %v464, 127
  %v466 = vand.u32 2147483647, %v43
  %v467 = vand.u32 %v466, 8388607
  %v468 = vor.u32 %v467, 8388608
  %v469 = vsub.s32 0, %v468
  %v470 = vadd.s32 %v465, 1
  %vm471 = vcmp.gt.s32.totalorder %v470, 0
  %v472 = vsel %vm471, %v470, 0
  %v473 = vshrl.u32 %v472, 5
  %v474 = vand.u32 %v472, 31
  %v475 = vsub.s32 32, %v474
  %v476 = vshrl.u32 683565275, %v475
  %v477 = vshll.u32 683565275, %v474
  %v478 = vshrl.u32 2475754826, %v475
  %v479 = vor.u32 %v477, %v478
  %v480 = vshll.u32 2475754826, %v474
  %v481 = vshrl.u32 2131351028, %v475
  %v482 = vor.u32 %v480, %v481
  %v483 = vshll.u32 2131351028, %v474
  %v484 = vshrl.u32 2102212464, %v475
  %v485 = vor.u32 %v483, %v484
  %v486 = vshll.u32 2102212464, %v474
  %v487 = vshrl.u32 920167782, %v475
  %v488 = vor.u32 %v486, %v487
  %v489 = vshll.u32 920167782, %v474
  %v490 = vshrl.u32 1326507024, %v475
  %v491 = vor.u32 %v489, %v490
  %vm492 = vcmp.lt.s32.totalorder %v473, 1
  %vm493 = vcmp.lt.s32.totalorder %v473, 2
  %vm494 = vcmp.lt.s32.totalorder %v473, 3
  %vm495 = vcmp.lt.s32.totalorder %v473, 4
  %v496 = vsel %vm492, %v476, %v479
  %v497 = vsel %vm495, %v485, 2102212464
  %v498 = vsel %vm494, %v482, %v497
  %v499 = vsel %vm493, %v496, %v498
  %v500 = vsel %vm492, %v479, %v482
  %v501 = vsel %vm495, %v488, 920167782
  %v502 = vsel %vm494, %v485, %v501
  %v503 = vsel %vm493, %v500, %v502
  %v504 = vsel %vm492, %v482, %v485
  %v505 = vsel %vm495, %v491, 1326507024
  %v506 = vsel %vm494, %v488, %v505
  %v507 = vsel %vm493, %v504, %v506
  %v508 = vshll.u32 %v468, 8
  %v509 = vmul.u32.u64.compose %v508, %v507
  %v510 = vextract.low.u32 %v509
  %v511 = vextract.high.u32 %v509
  %v512 = vmul.u32.u64.compose %v508, %v503
  %v513 = vextract.low.u32 %v512
  %v514 = vextract.high.u32 %v512
  %v515 = vmul.u32 %v508, %v499
  %v516 = vadd.s32 %v511, %v513
  %vm517 = vc.u32 %v511, %v513
  %v518 = vadd.s32 %v514, 1
  %v519 = vsel %vm517, %v518, %v514
  %v520 = vadd.s32 %v515, %v519
  %v521 = vadd.s32 %v520, 536870912
  %v522 = vshrl.u32 %v521, 30
  %v523 = vshll.u32 %v522, 30
  %v524 = vsub.s32 %v520, %v523
  %vm525 = vcmp.lt.s32.totalorder %v524, 0
  %v526 = vsub.s32 0, %v524
  %v527 = vsel %vm525, %v526, %v524
  %v528 = vclz %v527
  %v529 = vsub.s32 %v528, 2
  %vm530 = vcmp.gt.s32.totalorder 0, %v529
  %v531 = vsel %vm530, 0, %v529
  %v532 = vsub.s32 32, %v531
  %v533 = vshll.u32 %v524, %v531
  %v534 = vshrl.u32 %v516, %v532
  %v535 = vor.u32 %v533, %v534
  %v536 = vsub.s32 4294967266, %v531
  %v537 = vadd.s32 %v536, 127
  %v538 = vshll.u32 %v537, 23
  %v539 = vor.u32 4788187, %v538
  %v540 = vand.u32 2147483647, %v539
  %v542 = vcvt.s32.f32 %v535
  %v543 = vmul.f32 %v542, %v540
  %v544 = vxor.u32 %v543, 2147483648
  %v545 = vsel %vm462, %v544, %v543
  %v546 = vsub.s32 4, %v522
  %v547 = vsel %vm462, %v546, %v522
  %v548 = vsel %vm461, %v43, %v545
  %v549 = vsel %vm461, 0, %v547
  %v550 = vcosq.f32.pop %v548
  %v551 = vsinq.f32.pop %v548
  %vm552 = vweird.f32 %v43
  %v553 = vand.u32 %v549, 3
  %vm554 = vcmp.lt.s32.totalorder %v553, 2
  %vm555 = vcmp.eq.s32.totalorder %v553, 0
  %v556 = vxor.u32 %v551, 2147483648
  %v557 = vsel %vm555, %v550, %v556
  %vm558 = vcmp.eq.s32.totalorder %v553, 2
  %v559 = vxor.u32 %v550, 2147483648
  %v560 = vsel %vm558, %v559, %v551
  %v561 = vsel %vm554, %v557, %v560
  %v562 = vsel %vm552, nan, %v561
  %v563 = vand.u32 2147483647, %v44
  %vm564 = vcmp.le.f32.partialorder %v563, 0.7853982
  %vm565 = vcmp.lt.s32.totalorder %v44, 0
  %v566 = vand.u32 %v44, 2139095040
  %v567 = vshrl.u32 %v566, 23
  %v568 = vsub.s32 %v567, 127
  %v569 = vand.u32 2147483647, %v44
  %v570 = vand.u32 %v569, 8388607
  %v571 = vor.u32 %v570, 8388608
  %v572 = vsub.s32 0, %v571
  %v573 = vadd.s32 %v568, 1
  %vm574 = vcmp.gt.s32.totalorder %v573, 0
  %v575 = vsel %vm574, %v573, 0
  %v576 = vshrl.u32 %v575, 5
  %v577 = vand.u32 %v575, 31
  %v578 = vsub.s32 32, %v577
  %v579 = vshrl.u32 683565275, %v578
  %v580 = vshll.u32 683565275, %v577
  %v581 = vshrl.u32 2475754826, %v578
  %v582 = vor.u32 %v580, %v581
  %v583 = vshll.u32 2475754826, %v577
  %v584 = vshrl.u32 2131351028, %v578
  %v585 = vor.u32 %v583, %v584
  %v586 = vshll.u32 2131351028, %v577
  %v587 = vshrl.u32 2102212464, %v578
  %v588 = vor.u32 %v586, %v587
  %v589 = vshll.u32 2102212464, %v577
  %v590 = vshrl.u32 920167782, %v578
  %v591 = vor.u32 %v589, %v590
  %v592 = vshll.u32 920167782, %v577
  %v593 = vshrl.u32 1326507024, %v578
  %v594 = vor.u32 %v592, %v593
  %vm595 = vcmp.lt.s32.totalorder %v576, 1
  %vm596 = vcmp.lt.s32.totalorder %v576, 2
  %vm597 = vcmp.lt.s32.totalorder %v576, 3
  %vm598 = vcmp.lt.s32.totalorder %v576, 4
  %v599 = vsel %vm595, %v579, %v582
  %v600 = vsel %vm598, %v588, 2102212464
  %v601 = vsel %vm597, %v585, %v600
  %v602 = vsel %vm596, %v599, %v601
  %v603 = vsel %vm595, %v582, %v585
  %v604 = vsel %vm598, %v591, 920167782
  %v605 = vsel %vm597, %v588, %v604
  %v606 = vsel %vm596, %v603, %v605
  %v607 = vsel %vm595, %v585, %v588
  %v608 = vsel %vm598, %v594, 1326507024
  %v609 = vsel %vm597, %v591, %v608
  %v610 = vsel %vm596, %v607, %v609
  %v611 = vshll.u32 %v571, 8
  %v612 = vmul.u32.u64.compose %v611, %v610
  %v613 = vextract.low.u32 %v612
  %v614 = vextract.high.u32 %v612
  %v615 = vmul.u32.u64.compose %v611, %v606
  %v616 = vextract.low.u32 %v615
  %v617 = vextract.high.u32 %v615
  %v618 = vmul.u32 %v611, %v602
  %v619 = vadd.s32 %v614, %v616
  %vm620 = vc.u32 %v614, %v616
  %v621 = vadd.s32 %v617, 1
  %v622 = vsel %vm620, %v621, %v617
  %v623 = vadd.s32 %v618, %v622
  %v624 = vadd.s32 %v623, 536870912
  %v625 = vshrl.u32 %v624, 30
  %v626 = vshll.u32 %v625, 30
  %v627 = vsub.s32 %v623, %v626
  %vm628 = vcmp.lt.s32.totalorder %v627, 0
  %v629 = vsub.s32 0, %v627
  %v630 = vsel %vm628, %v629, %v627
  %v631 = vclz %v630
  %v632 = vsub.s32 %v631, 2
  %vm633 = vcmp.gt.s32.totalorder 0, %v632
  %v634 = vsel %vm633, 0, %v632
  %v635 = vsub.s32 32, %v634
  %v636 = vshll.u32 %v627, %v634
  %v637 = vshrl.u32 %v619, %v635
  %v638 = vor.u32 %v636, %v637
  %v639 = vsub.s32 4294967266, %v634
  %v640 = vadd.s32 %v639, 127
  %v641 = vshll.u32 %v640, 23
  %v642 = vor.u32 4788187, %v641
  %v643 = vand.u32 2147483647, %v642
  %v645 = vcvt.s32.f32 %v638
  %v646 = vmul.f32 %v645, %v643
  %v647 = vxor.u32 %v646, 2147483648
  %v648 = vsel %vm565, %v647, %v646
  %v649 = vsub.s32 4, %v625
  %v650 = vsel %vm565, %v649, %v625
  %v651 = vsel %vm564, %v44, %v648
  %v652 = vsel %vm564, 0, %v650
  %v653 = vcosq.f32.pop %v651
  %v654 = vsinq.f32.pop %v651
  %vm655 = vweird.f32 %v44
  %v656 = vand.u32 %v652, 3
  %vm657 = vcmp.lt.s32.totalorder %v656, 2
  %vm658 = vcmp.eq.s32.totalorder %v656, 0
  %v659 = vxor.u32 %v654, 2147483648
  %v660 = vsel %vm658, %v653, %v659
  %vm661 = vcmp.eq.s32.totalorder %v656, 2
  %v662 = vxor.u32 %v653, 2147483648
  %v663 = vsel %vm661, %v662, %v654
  %v664 = vsel %vm657, %v660, %v663
  %v665 = vsel %vm655, nan, %v664
  %vm669 = vcmask 1042432
  %v670 = vrot.slane %v148, 5
  %v671 = vrot.slane %v252, 5
  %v672 = vsel %vm669, %v670, %v671
  %v673 = vrot.slane %v356, 5
  %v674 = vsel %vm669, %v671, %v673
  %v682 = vrot.slane %v459, 5
  %v683 = vrot.slane %v562, 5
  %v684 = vsel %vm669, %v682, %v683
  %v685 = vrot.slane %v665, 5
  %v686 = vsel %vm669, %v683, %v685
  %v691 = vsel %vm669, %v11, %v670
  %v692 = vsel %vm669, %v673, %v682
  %v693 = vsel %vm669, %v685, 0.0
  %694 = vxpose.xlu0.b32.start [1/16] %v691, 128
  %695 = vxpose.xlu0.b32.cont [2/16] %v672, 128
  %696 = vxpose.xlu0.b32.cont [3/16] %v674, 128
  %697 = vxpose.xlu0.b32.cont [4/16] %v692, 128
  %698 = vxpose.xlu0.b32.cont [5/16] %v684, 128
  %699 = vxpose.xlu0.b32.cont [6/16] %v686, 128
  %700 = vxpose.xlu0.b32.cont [7/16] %v693, 128
  %701 = vxpose.xlu0.b32.cont [8/16] 0.0, 128
  %702 = vxpose.xlu0.b32.cont [9/16] 0.0, 128
  %703 = vxpose.xlu0.b32.cont [10/16] 0.0, 128
  %704 = vxpose.xlu0.b32.cont [11/16] 0.0, 128
  %705 = vxpose.xlu0.b32.cont [12/16] 0.0, 128
  %706 = vxpose.xlu0.b32.cont [13/16] 0.0, 128
  %707 = vxpose.xlu0.b32.cont [14/16] 0.0, 128
  %708 = vxpose.xlu0.b32.cont [15/16] 0.0, 128
  %709 = vxpose.xlu0.b32.end [16/16] 0.0, 128
  %v710 = vpop.trf.xlu0
  %v711 = vpop.trf.xlu0
  %v712 = vpop.trf.xlu0
  %v713 = vpop.trf.xlu0
  %v714 = vpop.trf.xlu0
  %v715 = vpop.trf.xlu0
  %v716 = vpop.trf.xlu0
  %v717 = vpop.trf.xlu0
  %v718 = vpop.trf.xlu0
  %v719 = vpop.trf.xlu0
  %v720 = vpop.trf.xlu0
  %v721 = vpop.trf.xlu0
  %v722 = vpop.trf.xlu0
  %v723 = vpop.trf.xlu0
  %v724 = vpop.trf.xlu0
  %v725 = vpop.trf.xlu0
  %vm726 = vcmask 416768
  %727 = vst.msk [vmem:[%s2] sm:$0xff] %vm726, %v710
  %728 = vst.msk [vmem:[%s2 + $0x8] sm:$0xff] %vm726, %v711
  %729 = vst.msk [vmem:[%s2 + $0x10] sm:$0xff] %vm726, %v712
  %730 = vst.msk [vmem:[%s2 + $0x18] sm:$0xff] %vm726, %v713
  %731 = vst.msk [vmem:[%s2 + $0x20] sm:$0xff] %vm726, %v714
  %732 = vst.msk [vmem:[%s2 + $0x28] sm:$0xff] %vm726, %v715
  %733 = vst.msk [vmem:[%s2 + $0x30] sm:$0xff] %vm726, %v716
  %734 = vst.msk [vmem:[%s2 + $0x38] sm:$0xff] %vm726, %v717
  %735 = vst.msk [vmem:[%s2 + $0x40] sm:$0xff] %vm726, %v718
  %736 = vst.msk [vmem:[%s2 + $0x48] sm:$0xff] %vm726, %v719
  %737 = vst.msk [vmem:[%s2 + $0x50] sm:$0xff] %vm726, %v720
  %738 = vst.msk [vmem:[%s2 + $0x58] sm:$0xff] %vm726, %v721
  %739 = vst.msk [vmem:[%s2 + $0x60] sm:$0xff] %vm726, %v722
  %740 = vst.msk [vmem:[%s2 + $0x68] sm:$0xff] %vm726, %v723
  %741 = vst.msk [vmem:[%s2 + $0x70] sm:$0xff] %vm726, %v724
  %742 = vst.msk [vmem:[%s2 + $0x78] sm:$0xff] %vm726, %v725
  // Predicated region
  $region10: #{tpu_custom_call.1} parent=0 // pred_check
    _
  $region11: #{tpu_custom_call.1} parent=0 // pred_check_branch
    %744 = sbr.rel (0) target = $region13
  $region12: #{tpu_custom_call.1} parent=0 // pred_region
    _
  $region13: #{tpu_custom_call.1} parent=0 // pred_fallthru
    _
  // Predicated region
  $region14: #{tpu_custom_call.1} parent=0 // pred_check
    _
  $region15: #{tpu_custom_call.1} parent=0 // pred_check_branch
    %746 = sbr.rel (0) target = $region17
  $region16: #{tpu_custom_call.1} parent=0 // pred_region
    _
  $region17: #{tpu_custom_call.1} parent=0 // pred_fallthru
    _

// kernel: tpu_custom_call.1
$region0: #{tpu_custom_call.1}
  #allocation0 [shape = 'u32[]', space=smem, size = 0x4, offset = 0x4, fixed_abs, tag = 'smem constant byte address 0x4 - core index']
  #allocation1 [shape = 'u32[144,128]{1,0:T(1,128)}', space=vmem, size = 0x12000, scoped, tag = 'internal scratch']
  %s0 = inlined_call_operand.vmem [shape: f32[128,3], index: 0, kind: input, shape index: {}]
  %s1 = inlined_call_operand.vmem [shape: f32[1,24], index: 1, kind: input, shape index: {}]
  %s2 = inlined_call_operand.vmem [shape: f32[128,51], index: 2, kind: output, shape index: {}]
  %s3 = sld [smem:[#allocation0]]
  $region41: #{tpu_custom_call.1} parent=0
    _
  %s5 = ssub.s32 1, %s3
  %s6 = scalar_select 0, %s5, %s3
  loop: start=0, step=1, limit=4
  $region2: #{tpu_custom_call.1} parent=0 // loop_pre_header
    _
  $region3: #{tpu_custom_call.1} parent=0 // loop_header
    %s8 = sphi 0, %s12
    %p9 = scmp.ge.s32.totalorder %s8, 4
    %s18 = sphi 0, %s20
    %s21 = sphi 0, %s18
    %s22 = sphi 0, %s21
    %s38 = sphi 0, %s22
    %s42 = sphi 0, %s42
    %s44 = sphi 0, %s42
    %s45 = sphi 0, %s44
    %s59 = sphi 0, %s45
    %s65 = sphi 0, %s67
    %s68 = sphi 0, %s65
    %s69 = sphi 0, %s68
    %s85 = sphi 0, %s69
  $region4: #{tpu_custom_call.1} parent=0 // loop_header_branch
    %11 = sbr.rel (%p9) target = $region8
  $region5: #{tpu_custom_call.1} parent=0 // loop_body
    %s13 = ssub.s32 %s8, 1
    %s14 = ssub.s32 %s8, 2
    %s15 = sadd.s32 %s8, 1
    %s16 = ssub.s32 %s8, %s15
    %p17 = scmp.eq.s32.totalorder %s16, 0
    %s19 = sadd.s32 %s18, 1
    %s20 = scalar_select %p17, %s18, %s19
    %p23 = pneg %p17
    %p24 = scmp.eq.s32.totalorder %s8, 1
    %p25 = por %p23, %p24
    %p26 = scmp.ne.s32.totalorder %s18, %s21
    %p27 = scmp.eq.s32.totalorder %s8, 0
    %p28 = por %p26, %p27
    %p29 = scmp.ne.s32.totalorder %s18, %s21
    %p30 = scmp.eq.s32.totalorder %s13, 1
    %p31 = por %p29, %p30
    %p32 = scmp.ne.s32.totalorder %s21, %s22
    %p33 = scmp.eq.s32.totalorder %s13, 0
    %p34 = por %p32, %p33
    %p35 = scmp.ne.s32.totalorder %s21, %s22
    %p36 = scmp.eq.s32.totalorder %s14, 1
    %p37 = por %p35, %p36
    %p39 = scmp.ne.s32.totalorder %s22, %s38
    %p40 = scmp.eq.s32.totalorder %s14, 0
    %p41 = por %p39, %p40
    %s43 = sadd.s32 %s42, 1
    %p46 = scmp.eq.s32.totalorder %s8, 1
    %p47 = scmp.ne.s32.totalorder %s42, %s44
    %p48 = scmp.eq.s32.totalorder %s8, 0
    %p49 = por %p47, %p48
    %p50 = scmp.ne.s32.totalorder %s42, %s44
    %p51 = scmp.eq.s32.totalorder %s13, 1
    %p52 = por %p50, %p51
    %p53 = scmp.ne.s32.totalorder %s44, %s45
    %p54 = scmp.eq.s32.totalorder %s13, 0
    %p55 = por %p53, %p54
    %p56 = scmp.ne.s32.totalorder %s44, %s45
    %p57 = scmp.eq.s32.totalorder %s14, 1
    %p58 = por %p56, %p57
    %p60 = scmp.ne.s32.totalorder %s45, %s59
    %p61 = scmp.eq.s32.totalorder %s14, 0
    %p62 = por %p60, %p61
    %s63 = ssub.s32 %s8, %s15
    %p64 = scmp.eq.s32.totalorder %s63, 0
    %s66 = sadd.s32 %s65, 1
    %s67 = scalar_select %p64, %s65, %s66
    %p70 = pneg %p64
    %p71 = scmp.eq.s32.totalorder %s8, 1
    %p72 = por %p70, %p71
    %p73 = scmp.ne.s32.totalorder %s65, %s68
    %p74 = scmp.eq.s32.totalorder %s8, 0
    %p75 = por %p73, %p74
    %p76 = scmp.ne.s32.totalorder %s65, %s68
    %p77 = scmp.eq.s32.totalorder %s13, 1
    %p78 = por %p76, %p77
    %p79 = scmp.ne.s32.totalorder %s68, %s69
    %p80 = scmp.eq.s32.totalorder %s13, 0
    %p81 = por %p79, %p80
    %p82 = scmp.ne.s32.totalorder %s68, %s69
    %p83 = scmp.eq.s32.totalorder %s14, 1
    %p84 = por %p82, %p83
    %p86 = scmp.ne.s32.totalorder %s69, %s85
    %p87 = scmp.eq.s32.totalorder %s14, 0
    %p88 = por %p86, %p87
    %p89 = scmp.le.s32.totalorder 1, %s8
    %p90 = scmp.lt.s32.totalorder %s8, 3
    %p91 = pnand %p89, %p90
    %p92 = pneg %p91
    // Predicated region
    $region9: #{tpu_custom_call.1} parent=5 // pred_check
      _
    $region10: #{tpu_custom_call.1} parent=5 // pred_check_branch
      %94 = sbr.rel (%p91) target = $region12
    $region11: #{tpu_custom_call.1} parent=5 // pred_region
      %s95 = ssub.s32 %s8, 1
      // Predicated region
      $region13: #{tpu_custom_call.1} parent=11 // pred_check
        %p96 = pneg %p55
      $region14: #{tpu_custom_call.1} parent=11 // pred_check_branch
        %98 = sbr.rel (%p96) target = $region16
      $region15: #{tpu_custom_call.1} parent=11 // pred_region
        _
      $region16: #{tpu_custom_call.1} parent=11 // pred_fallthru
        _
    $region12: #{tpu_custom_call.1} parent=5 // pred_fallthru
      _
    %p99 = scmp.lt.s32.totalorder %s8, 2
    // Predicated region
    $region17: #{tpu_custom_call.1} parent=5 // pred_check
      %p100 = pneg %p99
    $region18: #{tpu_custom_call.1} parent=5 // pred_check_branch
      %102 = sbr.rel (%p100) target = $region20
    $region19: #{tpu_custom_call.1} parent=5 // pred_region
      // Predicated region
      $region21: #{tpu_custom_call.1} parent=19 // pred_check
        %p103 = pneg %p28
      $region22: #{tpu_custom_call.1} parent=19 // pred_check_branch
        %105 = sbr.rel (%p103) target = $region24
      $region23: #{tpu_custom_call.1} parent=19 // pred_region
        %s106 = smul.u32 8, %s8
        %p107 = scmp.lt.s32.totalorder %s106, 15
        %s108 = scalar_select %p107, %s106, 15
        %s109 = smul.addr %s108, 8
        %s110 = scalar_lea.vmem %s0, %s109
        %s111 = smul.u32 8, %s8
      $region24: #{tpu_custom_call.1} parent=19 // pred_fallthru
        _
    $region20: #{tpu_custom_call.1} parent=5 // pred_fallthru
      _
    %p112 = scmp.le.s32.totalorder 1, %s8
    %p113 = scmp.lt.s32.totalorder %s8, 3
    %p114 = pnand %p112, %p113
    %p115 = pneg %p114
    // Predicated region
    $region25: #{tpu_custom_call.1} parent=5 // pred_check
      _
    $region26: #{tpu_custom_call.1} parent=5 // pred_check_branch
      %117 = sbr.rel (%p114) target = $region28
    $region27: #{tpu_custom_call.1} parent=5 // pred_region
      %s118 = ssub.s32 %s8, 1
      %s119 = smul.u32 8, %s13
      %p120 = scmp.lt.s32.totalorder %s119, 15
      %s121 = scalar_select %p120, %s119, 15
      %s122 = smul.addr %s121, 8
      %s123 = scalar_lea.vmem %s0, %s122
      %p124 = pneg %p34
      %p125 = pneg %p31
      %p126 = pneg %p55
      %p127 = pneg %p52
      %p128 = pneg %p81
      %p129 = pneg %p78
      %s130 = smul.u32 8, %s13
      %p131 = scmp.lt.s32.totalorder %s130, 15
      %s132 = scalar_select %p131, %s130, 15
      %s133 = smul.addr %s132, 8
      %s134 = scalar_lea.vmem %s2, %s133
      %s135 = smul.u32 8, %s13
      %p136 = scmp.lt.s32.totalorder %s135, 15
      %s137 = scalar_select %p136, %s135, 15
      %s138 = smul.addr %s137, 8
      %s139 = scalar_lea.vmem %s0, %s138
      %s140 = smul.u32 8, %s13
      %s141 = smul.u32 8, %s13
      %p142 = scmp.lt.s32.totalorder %s141, 15
      %s143 = scalar_select %p142, %s141, 15
      %s144 = smul.addr %s143, 8
      %s145 = scalar_lea.vmem %s2, %s144
      %s146 = smul.u32 8, %s13
      %v147 = vld [vmem:[%s139] sm:$0xff]
      %v148 = vld [vmem:[%s139 + $0x8] sm:$0xff]
      %v149 = vld [vmem:[%s139 + $0x10] sm:$0xff]
      %v150 = vld [vmem:[%s139 + $0x18] sm:$0xff]
      %v151 = vld [vmem:[%s139 + $0x20] sm:$0xff]
      %v152 = vld [vmem:[%s139 + $0x28] sm:$0xff]
      %v153 = vld [vmem:[%s139 + $0x30] sm:$0xff]
      %v154 = vld [vmem:[%s139 + $0x38] sm:$0xff]
      %156 = vset.pattern.permute.xlu0 0
      %157 = vperm.xlu0 %156, %v147
      %v158 = vpop.permute.xlu0 %157
      %161 = vset.pattern.permute.xlu0 0
      %162 = vperm.xlu0 %161, %v148
      %v163 = vpop.permute.xlu0 %162
      %166 = vset.pattern.permute.xlu0 0
      %167 = vperm.xlu0 %166, %v149
      %v168 = vpop.permute.xlu0 %167
      %171 = vset.pattern.permute.xlu0 0
      %172 = vperm.xlu0 %171, %v150
      %v173 = vpop.permute.xlu0 %172
      %176 = vset.pattern.permute.xlu0 0
      %177 = vperm.xlu0 %176, %v151
      %v178 = vpop.permute.xlu0 %177
      %181 = vset.pattern.permute.xlu0 0
      %182 = vperm.xlu0 %181, %v152
      %v183 = vpop.permute.xlu0 %182
      %186 = vset.pattern.permute.xlu0 0
      %187 = vperm.xlu0 %186, %v153
      %v188 = vpop.permute.xlu0 %187
      %191 = vset.pattern.permute.xlu0 0
      %192 = vperm.xlu0 %191, %v154
      %v193 = vpop.permute.xlu0 %192
      %195 = vset.pattern.permute.xlu0 1
      %196 = vperm.xlu0 %195, %v147
      %v197 = vpop.permute.xlu0 %196
      %199 = vset.pattern.permute.xlu0 1
      %200 = vperm.xlu0 %199, %v148
      %v201 = vpop.permute.xlu0 %200
      %203 = vset.pattern.permute.xlu0 1
      %204 = vperm.xlu0 %203, %v149
      %v205 = vpop.permute.xlu0 %204
      %207 = vset.pattern.permute.xlu0 1
      %208 = vperm.xlu0 %207, %v150
      %v209 = vpop.permute.xlu0 %208
      %211 = vset.pattern.permute.xlu0 1
      %212 = vperm.xlu0 %211, %v151
      %v213 = vpop.permute.xlu0 %212
      %215 = vset.pattern.permute.xlu0 1
      %216 = vperm.xlu0 %215, %v152
      %v217 = vpop.permute.xlu0 %216
      %219 = vset.pattern.permute.xlu0 1
      %220 = vperm.xlu0 %219, %v153
      %v221 = vpop.permute.xlu0 %220
      %223 = vset.pattern.permute.xlu0 1
      %224 = vperm.xlu0 %223, %v154
      %v225 = vpop.permute.xlu0 %224
      %227 = vset.pattern.permute.xlu0 2
      %228 = vperm.xlu0 %227, %v147
      %v229 = vpop.permute.xlu0 %228
      %231 = vset.pattern.permute.xlu0 2
      %232 = vperm.xlu0 %231, %v148
      %v233 = vpop.permute.xlu0 %232
      %235 = vset.pattern.permute.xlu0 2
      %236 = vperm.xlu0 %235, %v149
      %v237 = vpop.permute.xlu0 %236
      %239 = vset.pattern.permute.xlu0 2
      %240 = vperm.xlu0 %239, %v150
      %v241 = vpop.permute.xlu0 %240
      %243 = vset.pattern.permute.xlu0 2
      %244 = vperm.xlu0 %243, %v151
      %v245 = vpop.permute.xlu0 %244
      %247 = vset.pattern.permute.xlu0 2
      %248 = vperm.xlu0 %247, %v152
      %v249 = vpop.permute.xlu0 %248
      %251 = vset.pattern.permute.xlu0 2
      %252 = vperm.xlu0 %251, %v153
      %v253 = vpop.permute.xlu0 %252
      %255 = vset.pattern.permute.xlu0 2
      %256 = vperm.xlu0 %255, %v154
      %v257 = vpop.permute.xlu0 %256
      %vm259 = vcmask 64512
      %v260 = vsel %vm259, %v158, %v197
      %v261 = vsel %vm259, %v163, %v201
      %v262 = vsel %vm259, %v168, %v205
      %v263 = vsel %vm259, %v173, %v209
      %v264 = vsel %vm259, %v178, %v213
      %v265 = vsel %vm259, %v183, %v217
      %v266 = vsel %vm259, %v188, %v221
      %v267 = vsel %vm259, %v193, %v225
      %vm268 = vcmask 130048
      %v269 = vsel %vm268, %v260, %v229
      %v270 = vsel %vm268, %v261, %v233
      %v271 = vsel %vm268, %v262, %v237
      %v272 = vsel %vm268, %v263, %v241
      %v273 = vsel %vm268, %v264, %v245
      %v274 = vsel %vm268, %v265, %v249
      %v275 = vsel %vm268, %v266, %v253
      %v276 = vsel %vm268, %v267, %v257
      %v277 = vld [vmem:[%s1] sm:$0x1]
      %v279 = vlaneseq
      %v280 = vshrl.u32 %v279, 7
      %v281 = vsub.s32 0, %v280
      %v282 = vrot.slane %v277, %v281
      %v284 = vmul.f32 %v269, %v282
      %v285 = vmul.f32 %v270, %v282
      %v286 = vmul.f32 %v271, %v282
      %v287 = vmul.f32 %v272, %v282
      %v288 = vmul.f32 %v273, %v282
      %v289 = vmul.f32 %v274, %v282
      %v290 = vmul.f32 %v275, %v282
      %v291 = vmul.f32 %v276, %v282
      %v292 = vand.u32 2147483647, %v284
      %vm293 = vcmp.le.f32.partialorder %v292, 0.7853982
      %vm294 = vcmp.lt.s32.totalorder %v284, 0
      %v295 = vand.u32 %v284, 2139095040
      %v296 = vshrl.u32 %v295, 23
      %v297 = vsub.s32 %v296, 127
      %v298 = vand.u32 2147483647, %v284
      %v299 = vand.u32 %v298, 8388607
      %v300 = vor.u32 %v299, 8388608
      %v301 = vsub.s32 0, %v300
      %v302 = vadd.s32 %v297, 1
      %vm303 = vcmp.gt.s32.totalorder %v302, 0
      %v304 = vsel %vm303, %v302, 0
      %v305 = vshrl.u32 %v304, 5
      %v306 = vand.u32 %v304, 31
      %v307 = vsub.s32 32, %v306
      %v308 = vshrl.u32 683565275, %v307
      %v309 = vshll.u32 683565275, %v306
      %v310 = vshrl.u32 2475754826, %v307
      %v311 = vor.u32 %v309, %v310
      %v312 = vshll.u32 2475754826, %v306
      %v313 = vshrl.u32 2131351028, %v307
      %v314 = vor.u32 %v312, %v313
      %v315 = vshll.u32 2131351028, %v306
      %v316 = vshrl.u32 2102212464, %v307
      %v317 = vor.u32 %v315, %v316
      %v318 = vshll.u32 2102212464, %v306
      %v319 = vshrl.u32 920167782, %v307
      %v320 = vor.u32 %v318, %v319
      %v321 = vshll.u32 920167782, %v306
      %v322 = vshrl.u32 1326507024, %v307
      %v323 = vor.u32 %v321, %v322
      %vm324 = vcmp.lt.s32.totalorder %v305, 1
      %vm325 = vcmp.lt.s32.totalorder %v305, 2
      %vm326 = vcmp.lt.s32.totalorder %v305, 3
      %vm327 = vcmp.lt.s32.totalorder %v305, 4
      %v328 = vsel %vm324, %v308, %v311
      %v329 = vsel %vm327, %v317, 2102212464
      %v330 = vsel %vm326, %v314, %v329
      %v331 = vsel %vm325, %v328, %v330
      %v332 = vsel %vm324, %v311, %v314
      %v333 = vsel %vm327, %v320, 920167782
      %v334 = vsel %vm326, %v317, %v333
      %v335 = vsel %vm325, %v332, %v334
      %v336 = vsel %vm324, %v314, %v317
      %v337 = vsel %vm327, %v323, 1326507024
      %v338 = vsel %vm326, %v320, %v337
      %v339 = vsel %vm325, %v336, %v338
      %v340 = vshll.u32 %v300, 8
      %v341 = vmul.u32.u64.compose %v340, %v339
      %v342 = vextract.low.u32 %v341
      %v343 = vextract.high.u32 %v341
      %v344 = vmul.u32.u64.compose %v340, %v335
      %v345 = vextract.low.u32 %v344
      %v346 = vextract.high.u32 %v344
      %v347 = vmul.u32 %v340, %v331
      %v348 = vadd.s32 %v343, %v345
      %vm349 = vc.u32 %v343, %v345
      %v350 = vadd.s32 %v346, 1
      %v351 = vsel %vm349, %v350, %v346
      %v352 = vadd.s32 %v347, %v351
      %v353 = vadd.s32 %v352, 536870912
      %v354 = vshrl.u32 %v353, 30
      %v355 = vshll.u32 %v354, 30
      %v356 = vsub.s32 %v352, %v355
      %vm357 = vcmp.lt.s32.totalorder %v356, 0
      %v358 = vsub.s32 0, %v356
      %v359 = vsel %vm357, %v358, %v356
      %v360 = vclz %v359
      %v361 = vsub.s32 %v360, 2
      %vm362 = vcmp.gt.s32.totalorder 0, %v361
      %v363 = vsel %vm362, 0, %v361
      %v364 = vsub.s32 32, %v363
      %v365 = vshll.u32 %v356, %v363
      %v366 = vshrl.u32 %v348, %v364
      %v367 = vor.u32 %v365, %v366
      %v368 = vsub.s32 4294967266, %v363
      %v369 = vadd.s32 %v368, 127
      %v370 = vshll.u32 %v369, 23
      %v371 = vor.u32 4788187, %v370
      %v372 = vand.u32 2147483647, %v371
      %v374 = vcvt.s32.f32 %v367
      %v375 = vmul.f32 %v374, %v372
      %v376 = vxor.u32 %v375, 2147483648
      %v377 = vsel %vm294, %v376, %v375
      %v378 = vsub.s32 4, %v354
      %v379 = vsel %vm294, %v378, %v354
      %v380 = vsel %vm293, %v284, %v377
      %v381 = vsel %vm293, 0, %v379
      %v382 = vcosq.f32.pop %v380
      %v383 = vsinq.f32.pop %v380
      %vm384 = vweird.f32 %v284
      %v385 = vadd.s32 %v381, 3
      %v386 = vand.u32 %v385, 3
      %vm387 = vcmp.lt.s32.totalorder %v386, 2
      %vm388 = vcmp.eq.s32.totalorder %v386, 0
      %v389 = vxor.u32 %v383, 2147483648
      %v390 = vsel %vm388, %v382, %v389
      %vm391 = vcmp.eq.s32.totalorder %v386, 2
      %v392 = vxor.u32 %v382, 2147483648
      %v393 = vsel %vm391, %v392, %v383
      %v394 = vsel %vm387, %v390, %v393
      %v395 = vsel %vm384, nan, %v394
      %v396 = vand.u32 2147483647, %v285
      %vm397 = vcmp.le.f32.partialorder %v396, 0.7853982
      %vm398 = vcmp.lt.s32.totalorder %v285, 0
      %v399 = vand.u32 %v285, 2139095040
      %v400 = vshrl.u32 %v399, 23
      %v401 = vsub.s32 %v400, 127
      %v402 = vand.u32 2147483647, %v285
      %v403 = vand.u32 %v402, 8388607
      %v404 = vor.u32 %v403, 8388608
      %v405 = vsub.s32 0, %v404
      %v406 = vadd.s32 %v401, 1
      %vm407 = vcmp.gt.s32.totalorder %v406, 0
      %v408 = vsel %vm407, %v406, 0
      %v409 = vshrl.u32 %v408, 5
      %v410 = vand.u32 %v408, 31
      %v411 = vsub.s32 32, %v410
      %v412 = vshrl.u32 683565275, %v411
      %v413 = vshll.u32 683565275, %v410
      %v414 = vshrl.u32 2475754826, %v411
      %v415 = vor.u32 %v413, %v414
      %v416 = vshll.u32 2475754826, %v410
      %v417 = vshrl.u32 2131351028, %v411
      %v418 = vor.u32 %v416, %v417
      %v419 = vshll.u32 2131351028, %v410
      %v420 = vshrl.u32 2102212464, %v411
      %v421 = vor.u32 %v419, %v420
      %v422 = vshll.u32 2102212464, %v410
      %v423 = vshrl.u32 920167782, %v411
      %v424 = vor.u32 %v422, %v423
      %v425 = vshll.u32 920167782, %v410
      %v426 = vshrl.u32 1326507024, %v411
      %v427 = vor.u32 %v425, %v426
      %vm428 = vcmp.lt.s32.totalorder %v409, 1
      %vm429 = vcmp.lt.s32.totalorder %v409, 2
      %vm430 = vcmp.lt.s32.totalorder %v409, 3
      %vm431 = vcmp.lt.s32.totalorder %v409, 4
      %v432 = vsel %vm428, %v412, %v415
      %v433 = vsel %vm431, %v421, 2102212464
      %v434 = vsel %vm430, %v418, %v433
      %v435 = vsel %vm429, %v432, %v434
      %v436 = vsel %vm428, %v415, %v418
      %v437 = vsel %vm431, %v424, 920167782
      %v438 = vsel %vm430, %v421, %v437
      %v439 = vsel %vm429, %v436, %v438
      %v440 = vsel %vm428, %v418, %v421
      %v441 = vsel %vm431, %v427, 1326507024
      %v442 = vsel %vm430, %v424, %v441
      %v443 = vsel %vm429, %v440, %v442
      %v444 = vshll.u32 %v404, 8
      %v445 = vmul.u32.u64.compose %v444, %v443
      %v446 = vextract.low.u32 %v445
      %v447 = vextract.high.u32 %v445
      %v448 = vmul.u32.u64.compose %v444, %v439
      %v449 = vextract.low.u32 %v448
      %v450 = vextract.high.u32 %v448
      %v451 = vmul.u32 %v444, %v435
      %v452 = vadd.s32 %v447, %v449
      %vm453 = vc.u32 %v447, %v449
      %v454 = vadd.s32 %v450, 1
      %v455 = vsel %vm453, %v454, %v450
      %v456 = vadd.s32 %v451, %v455
      %v457 = vadd.s32 %v456, 536870912
      %v458 = vshrl.u32 %v457, 30
      %v459 = vshll.u32 %v458, 30
      %v460 = vsub.s32 %v456, %v459
      %vm461 = vcmp.lt.s32.totalorder %v460, 0
      %v462 = vsub.s32 0, %v460
      %v463 = vsel %vm461, %v462, %v460
      %v464 = vclz %v463
      %v465 = vsub.s32 %v464, 2
      %vm466 = vcmp.gt.s32.totalorder 0, %v465
      %v467 = vsel %vm466, 0, %v465
      %v468 = vsub.s32 32, %v467
      %v469 = vshll.u32 %v460, %v467
      %v470 = vshrl.u32 %v452, %v468
      %v471 = vor.u32 %v469, %v470
      %v472 = vsub.s32 4294967266, %v467
      %v473 = vadd.s32 %v472, 127
      %v474 = vshll.u32 %v473, 23
      %v475 = vor.u32 4788187, %v474
      %v476 = vand.u32 2147483647, %v475
      %v478 = vcvt.s32.f32 %v471
      %v479 = vmul.f32 %v478, %v476
      %v480 = vxor.u32 %v479, 2147483648
      %v481 = vsel %vm398, %v480, %v479
      %v482 = vsub.s32 4, %v458
      %v483 = vsel %vm398, %v482, %v458
      %v484 = vsel %vm397, %v285, %v481
      %v485 = vsel %vm397, 0, %v483
      %v486 = vcosq.f32.pop %v484
      %v487 = vsinq.f32.pop %v484
      %vm488 = vweird.f32 %v285
      %v489 = vadd.s32 %v485, 3
      %v490 = vand.u32 %v489, 3
      %vm491 = vcmp.lt.s32.totalorder %v490, 2
      %vm492 = vcmp.eq.s32.totalorder %v490, 0
      %v493 = vxor.u32 %v487, 2147483648
      %v494 = vsel %vm492, %v486, %v493
      %vm495 = vcmp.eq.s32.totalorder %v490, 2
      %v496 = vxor.u32 %v486, 2147483648
      %v497 = vsel %vm495, %v496, %v487
      %v498 = vsel %vm491, %v494, %v497
      %v499 = vsel %vm488, nan, %v498
      %v500 = vand.u32 2147483647, %v286
      %vm501 = vcmp.le.f32.partialorder %v500, 0.7853982
      %vm502 = vcmp.lt.s32.totalorder %v286, 0
      %v503 = vand.u32 %v286, 2139095040
      %v504 = vshrl.u32 %v503, 23
      %v505 = vsub.s32 %v504, 127
      %v506 = vand.u32 2147483647, %v286
      %v507 = vand.u32 %v506, 8388607
      %v508 = vor.u32 %v507, 8388608
      %v509 = vsub.s32 0, %v508
      %v510 = vadd.s32 %v505, 1
      %vm511 = vcmp.gt.s32.totalorder %v510, 0
      %v512 = vsel %vm511, %v510, 0
      %v513 = vshrl.u32 %v512, 5
      %v514 = vand.u32 %v512, 31
      %v515 = vsub.s32 32, %v514
      %v516 = vshrl.u32 683565275, %v515
      %v517 = vshll.u32 683565275, %v514
      %v518 = vshrl.u32 2475754826, %v515
      %v519 = vor.u32 %v517, %v518
      %v520 = vshll.u32 2475754826, %v514
      %v521 = vshrl.u32 2131351028, %v515
      %v522 = vor.u32 %v520, %v521
      %v523 = vshll.u32 2131351028, %v514
      %v524 = vshrl.u32 2102212464, %v515
      %v525 = vor.u32 %v523, %v524
      %v526 = vshll.u32 2102212464, %v514
      %v527 = vshrl.u32 920167782, %v515
      %v528 = vor.u32 %v526, %v527
      %v529 = vshll.u32 920167782, %v514
      %v530 = vshrl.u32 1326507024, %v515
      %v531 = vor.u32 %v529, %v530
      %vm532 = vcmp.lt.s32.totalorder %v513, 1
      %vm533 = vcmp.lt.s32.totalorder %v513, 2
      %vm534 = vcmp.lt.s32.totalorder %v513, 3
      %vm535 = vcmp.lt.s32.totalorder %v513, 4
      %v536 = vsel %vm532, %v516, %v519
      %v537 = vsel %vm535, %v525, 2102212464
      %v538 = vsel %vm534, %v522, %v537
      %v539 = vsel %vm533, %v536, %v538
      %v540 = vsel %vm532, %v519, %v522
      %v541 = vsel %vm535, %v528, 920167782
      %v542 = vsel %vm534, %v525, %v541
      %v543 = vsel %vm533, %v540, %v542
      %v544 = vsel %vm532, %v522, %v525
      %v545 = vsel %vm535, %v531, 1326507024
      %v546 = vsel %vm534, %v528, %v545
      %v547 = vsel %vm533, %v544, %v546
      %v548 = vshll.u32 %v508, 8
      %v549 = vmul.u32.u64.compose %v548, %v547
      %v550 = vextract.low.u32 %v549
      %v551 = vextract.high.u32 %v549
      %v552 = vmul.u32.u64.compose %v548, %v543
      %v553 = vextract.low.u32 %v552
      %v554 = vextract.high.u32 %v552
      %v555 = vmul.u32 %v548, %v539
      %v556 = vadd.s32 %v551, %v553
      %vm557 = vc.u32 %v551, %v553
      %v558 = vadd.s32 %v554, 1
      %v559 = vsel %vm557, %v558, %v554
      %v560 = vadd.s32 %v555, %v559
      %v561 = vadd.s32 %v560, 536870912
      %v562 = vshrl.u32 %v561, 30
      %v563 = vshll.u32 %v562, 30
      %v564 = vsub.s32 %v560, %v563
      %vm565 = vcmp.lt.s32.totalorder %v564, 0
      %v566 = vsub.s32 0, %v564
      %v567 = vsel %vm565, %v566, %v564
      %v568 = vclz %v567
      %v569 = vsub.s32 %v568, 2
      %vm570 = vcmp.gt.s32.totalorder 0, %v569
      %v571 = vsel %vm570, 0, %v569
      %v572 = vsub.s32 32, %v571
      %v573 = vshll.u32 %v564, %v571
      %v574 = vshrl.u32 %v556, %v572
      %v575 = vor.u32 %v573, %v574
      %v576 = vsub.s32 4294967266, %v571
      %v577 = vadd.s32 %v576, 127
      %v578 = vshll.u32 %v577, 23
      %v579 = vor.u32 4788187, %v578
      %v580 = vand.u32 2147483647, %v579
      %v582 = vcvt.s32.f32 %v575
      %v583 = vmul.f32 %v582, %v580
      %v584 = vxor.u32 %v583, 2147483648
      %v585 = vsel %vm502, %v584, %v583
      %v586 = vsub.s32 4, %v562
      %v587 = vsel %vm502, %v586, %v562
      %v588 = vsel %vm501, %v286, %v585
      %v589 = vsel %vm501, 0, %v587
      %v590 = vcosq.f32.pop %v588
      %v591 = vsinq.f32.pop %v588
      %vm592 = vweird.f32 %v286
      %v593 = vadd.s32 %v589, 3
      %v594 = vand.u32 %v593, 3
      %vm595 = vcmp.lt.s32.totalorder %v594, 2
      %vm596 = vcmp.eq.s32.totalorder %v594, 0
      %v597 = vxor.u32 %v591, 2147483648
      %v598 = vsel %vm596, %v590, %v597
      %vm599 = vcmp.eq.s32.totalorder %v594, 2
      %v600 = vxor.u32 %v590, 2147483648
      %v601 = vsel %vm599, %v600, %v591
      %v602 = vsel %vm595, %v598, %v601
      %v603 = vsel %vm592, nan, %v602
      %v604 = vand.u32 2147483647, %v287
      %vm605 = vcmp.le.f32.partialorder %v604, 0.7853982
      %vm606 = vcmp.lt.s32.totalorder %v287, 0
      %v607 = vand.u32 %v287, 2139095040
      %v608 = vshrl.u32 %v607, 23
      %v609 = vsub.s32 %v608, 127
      %v610 = vand.u32 2147483647, %v287
      %v611 = vand.u32 %v610, 8388607
      %v612 = vor.u32 %v611, 8388608
      %v613 = vsub.s32 0, %v612
      %v614 = vadd.s32 %v609, 1
      %vm615 = vcmp.gt.s32.totalorder %v614, 0
      %v616 = vsel %vm615, %v614, 0
      %v617 = vshrl.u32 %v616, 5
      %v618 = vand.u32 %v616, 31
      %v619 = vsub.s32 32, %v618
      %v620 = vshrl.u32 683565275, %v619
      %v621 = vshll.u32 683565275, %v618
      %v622 = vshrl.u32 2475754826, %v619
      %v623 = vor.u32 %v621, %v622
      %v624 = vshll.u32 2475754826, %v618
      %v625 = vshrl.u32 2131351028, %v619
      %v626 = vor.u32 %v624, %v625
      %v627 = vshll.u32 2131351028, %v618
      %v628 = vshrl.u32 2102212464, %v619
      %v629 = vor.u32 %v627, %v628
      %v630 = vshll.u32 2102212464, %v618
      %v631 = vshrl.u32 920167782, %v619
      %v632 = vor.u32 %v630, %v631
      %v633 = vshll.u32 920167782, %v618
      %v634 = vshrl.u32 1326507024, %v619
      %v635 = vor.u32 %v633, %v634
      %vm636 = vcmp.lt.s32.totalorder %v617, 1
      %vm637 = vcmp.lt.s32.totalorder %v617, 2
      %vm638 = vcmp.lt.s32.totalorder %v617, 3
      %vm639 = vcmp.lt.s32.totalorder %v617, 4
      %v640 = vsel %vm636, %v620, %v623
      %v641 = vsel %vm639, %v629, 2102212464
      %v642 = vsel %vm638, %v626, %v641
      %v643 = vsel %vm637, %v640, %v642
      %v644 = vsel %vm636, %v623, %v626
      %v645 = vsel %vm639, %v632, 920167782
      %v646 = vsel %vm638, %v629, %v645
      %v647 = vsel %vm637, %v644, %v646
      %v648 = vsel %vm636, %v626, %v629
      %v649 = vsel %vm639, %v635, 1326507024
      %v650 = vsel %vm638, %v632, %v649
      %v651 = vsel %vm637, %v648, %v650
      %v652 = vshll.u32 %v612, 8
      %v653 = vmul.u32.u64.compose %v652, %v651
      %v654 = vextract.low.u32 %v653
      %v655 = vextract.high.u32 %v653
      %v656 = vmul.u32.u64.compose %v652, %v647
      %v657 = vextract.low.u32 %v656
      %v658 = vextract.high.u32 %v656
      %v659 = vmul.u32 %v652, %v643
      %v660 = vadd.s32 %v655, %v657
      %vm661 = vc.u32 %v655, %v657
      %v662 = vadd.s32 %v658, 1
      %v663 = vsel %vm661, %v662, %v658
      %v664 = vadd.s32 %v659, %v663
      %v665 = vadd.s32 %v664, 536870912
      %v666 = vshrl.u32 %v665, 30
      %v667 = vshll.u32 %v666, 30
      %v668 = vsub.s32 %v664, %v667
      %vm669 = vcmp.lt.s32.totalorder %v668, 0
      %v670 = vsub.s32 0, %v668
      %v671 = vsel %vm669, %v670, %v668
      %v672 = vclz %v671
      %v673 = vsub.s32 %v672, 2
      %vm674 = vcmp.gt.s32.totalorder 0, %v673
      %v675 = vsel %vm674, 0, %v673
      %v676 = vsub.s32 32, %v675
      %v677 = vshll.u32 %v668, %v675
      %v678 = vshrl.u32 %v660, %v676
      %v679 = vor.u32 %v677, %v678
      %v680 = vsub.s32 4294967266, %v675
      %v681 = vadd.s32 %v680, 127
      %v682 = vshll.u32 %v681, 23
      %v683 = vor.u32 4788187, %v682
      %v684 = vand.u32 2147483647, %v683
      %v686 = vcvt.s32.f32 %v679
      %v687 = vmul.f32 %v686, %v684
      %v688 = vxor.u32 %v687, 2147483648
      %v689 = vsel %vm606, %v688, %v687
      %v690 = vsub.s32 4, %v666
      %v691 = vsel %vm606, %v690, %v666
      %v692 = vsel %vm605, %v287, %v689
      %v693 = vsel %vm605, 0, %v691
      %v694 = vcosq.f32.pop %v692
      %v695 = vsinq.f32.pop %v692
      %vm696 = vweird.f32 %v287
      %v697 = vadd.s32 %v693, 3
      %v698 = vand.u32 %v697, 3
      %vm699 = vcmp.lt.s32.totalorder %v698, 2
      %vm700 = vcmp.eq.s32.totalorder %v698, 0
      %v701 = vxor.u32 %v695, 2147483648
      %v702 = vsel %vm700, %v694, %v701
      %vm703 = vcmp.eq.s32.totalorder %v698, 2
      %v704 = vxor.u32 %v694, 2147483648
      %v705 = vsel %vm703, %v704, %v695
      %v706 = vsel %vm699, %v702, %v705
      %v707 = vsel %vm696, nan, %v706
      %v708 = vand.u32 2147483647, %v288
      %vm709 = vcmp.le.f32.partialorder %v708, 0.7853982
      %vm710 = vcmp.lt.s32.totalorder %v288, 0
      %v711 = vand.u32 %v288, 2139095040
      %v712 = vshrl.u32 %v711, 23
      %v713 = vsub.s32 %v712, 127
      %v714 = vand.u32 2147483647, %v288
      %v715 = vand.u32 %v714, 8388607
      %v716 = vor.u32 %v715, 8388608
      %v717 = vsub.s32 0, %v716
      %v718 = vadd.s32 %v713, 1
      %vm719 = vcmp.gt.s32.totalorder %v718, 0
      %v720 = vsel %vm719, %v718, 0
      %v721 = vshrl.u32 %v720, 5
      %v722 = vand.u32 %v720, 31
      %v723 = vsub.s32 32, %v722
      %v724 = vshrl.u32 683565275, %v723
      %v725 = vshll.u32 683565275, %v722
      %v726 = vshrl.u32 2475754826, %v723
      %v727 = vor.u32 %v725, %v726
      %v728 = vshll.u32 2475754826, %v722
      %v729 = vshrl.u32 2131351028, %v723
      %v730 = vor.u32 %v728, %v729
      %v731 = vshll.u32 2131351028, %v722
      %v732 = vshrl.u32 2102212464, %v723
      %v733 = vor.u32 %v731, %v732
      %v734 = vshll.u32 2102212464, %v722
      %v735 = vshrl.u32 920167782, %v723
      %v736 = vor.u32 %v734, %v735
      %v737 = vshll.u32 920167782, %v722
      %v738 = vshrl.u32 1326507024, %v723
      %v739 = vor.u32 %v737, %v738
      %vm740 = vcmp.lt.s32.totalorder %v721, 1
      %vm741 = vcmp.lt.s32.totalorder %v721, 2
      %vm742 = vcmp.lt.s32.totalorder %v721, 3
      %vm743 = vcmp.lt.s32.totalorder %v721, 4
      %v744 = vsel %vm740, %v724, %v727
      %v745 = vsel %vm743, %v733, 2102212464
      %v746 = vsel %vm742, %v730, %v745
      %v747 = vsel %vm741, %v744, %v746
      %v748 = vsel %vm740, %v727, %v730
      %v749 = vsel %vm743, %v736, 920167782
      %v750 = vsel %vm742, %v733, %v749
      %v751 = vsel %vm741, %v748, %v750
      %v752 = vsel %vm740, %v730, %v733
      %v753 = vsel %vm743, %v739, 1326507024
      %v754 = vsel %vm742, %v736, %v753
      %v755 = vsel %vm741, %v752, %v754
      %v756 = vshll.u32 %v716, 8
      %v757 = vmul.u32.u64.compose %v756, %v755
      %v758 = vextract.low.u32 %v757
      %v759 = vextract.high.u32 %v757
      %v760 = vmul.u32.u64.compose %v756, %v751
      %v761 = vextract.low.u32 %v760
      %v762 = vextract.high.u32 %v760
      %v763 = vmul.u32 %v756, %v747
      %v764 = vadd.s32 %v759, %v761
      %vm765 = vc.u32 %v759, %v761
      %v766 = vadd.s32 %v762, 1
      %v767 = vsel %vm765, %v766, %v762
      %v768 = vadd.s32 %v763, %v767
      %v769 = vadd.s32 %v768, 536870912
      %v770 = vshrl.u32 %v769, 30
      %v771 = vshll.u32 %v770, 30
      %v772 = vsub.s32 %v768, %v771
      %vm773 = vcmp.lt.s32.totalorder %v772, 0
      %v774 = vsub.s32 0, %v772
      %v775 = vsel %vm773, %v774, %v772
      %v776 = vclz %v775
      %v777 = vsub.s32 %v776, 2
      %vm778 = vcmp.gt.s32.totalorder 0, %v777
      %v779 = vsel %vm778, 0, %v777
      %v780 = vsub.s32 32, %v779
      %v781 = vshll.u32 %v772, %v779
      %v782 = vshrl.u32 %v764, %v780
      %v783 = vor.u32 %v781, %v782
      %v784 = vsub.s32 4294967266, %v779
      %v785 = vadd.s32 %v784, 127
      %v786 = vshll.u32 %v785, 23
      %v787 = vor.u32 4788187, %v786
      %v788 = vand.u32 2147483647, %v787
      %v790 = vcvt.s32.f32 %v783
      %v791 = vmul.f32 %v790, %v788
      %v792 = vxor.u32 %v791, 2147483648
      %v793 = vsel %vm710, %v792, %v791
      %v794 = vsub.s32 4, %v770
      %v795 = vsel %vm710, %v794, %v770
      %v796 = vsel %vm709, %v288, %v793
      %v797 = vsel %vm709, 0, %v795
      %v798 = vcosq.f32.pop %v796
      %v799 = vsinq.f32.pop %v796
      %vm800 = vweird.f32 %v288
      %v801 = vadd.s32 %v797, 3
      %v802 = vand.u32 %v801, 3
      %vm803 = vcmp.lt.s32.totalorder %v802, 2
      %vm804 = vcmp.eq.s32.totalorder %v802, 0
      %v805 = vxor.u32 %v799, 2147483648
      %v806 = vsel %vm804, %v798, %v805
      %vm807 = vcmp.eq.s32.totalorder %v802, 2
      %v808 = vxor.u32 %v798, 2147483648
      %v809 = vsel %vm807, %v808, %v799
      %v810 = vsel %vm803, %v806, %v809
      %v811 = vsel %vm800, nan, %v810
      %v812 = vand.u32 2147483647, %v289
      %vm813 = vcmp.le.f32.partialorder %v812, 0.7853982
      %vm814 = vcmp.lt.s32.totalorder %v289, 0
      %v815 = vand.u32 %v289, 2139095040
      %v816 = vshrl.u32 %v815, 23
      %v817 = vsub.s32 %v816, 127
      %v818 = vand.u32 2147483647, %v289
      %v819 = vand.u32 %v818, 8388607
      %v820 = vor.u32 %v819, 8388608
      %v821 = vsub.s32 0, %v820
      %v822 = vadd.s32 %v817, 1
      %vm823 = vcmp.gt.s32.totalorder %v822, 0
      %v824 = vsel %vm823, %v822, 0
      %v825 = vshrl.u32 %v824, 5
      %v826 = vand.u32 %v824, 31
      %v827 = vsub.s32 32, %v826
      %v828 = vshrl.u32 683565275, %v827
      %v829 = vshll.u32 683565275, %v826
      %v830 = vshrl.u32 2475754826, %v827
      %v831 = vor.u32 %v829, %v830
      %v832 = vshll.u32 2475754826, %v826
      %v833 = vshrl.u32 2131351028, %v827
      %v834 = vor.u32 %v832, %v833
      %v835 = vshll.u32 2131351028, %v826
      %v836 = vshrl.u32 2102212464, %v827
      %v837 = vor.u32 %v835, %v836
      %v838 = vshll.u32 2102212464, %v826
      %v839 = vshrl.u32 920167782, %v827
      %v840 = vor.u32 %v838, %v839
      %v841 = vshll.u32 920167782, %v826
      %v842 = vshrl.u32 1326507024, %v827
      %v843 = vor.u32 %v841, %v842
      %vm844 = vcmp.lt.s32.totalorder %v825, 1
      %vm845 = vcmp.lt.s32.totalorder %v825, 2
      %vm846 = vcmp.lt.s32.totalorder %v825, 3
      %vm847 = vcmp.lt.s32.totalorder %v825, 4
      %v848 = vsel %vm844, %v828, %v831
      %v849 = vsel %vm847, %v837, 2102212464
      %v850 = vsel %vm846, %v834, %v849
      %v851 = vsel %vm845, %v848, %v850
      %v852 = vsel %vm844, %v831, %v834
      %v853 = vsel %vm847, %v840, 920167782
      %v854 = vsel %vm846, %v837, %v853
      %v855 = vsel %vm845, %v852, %v854
      %v856 = vsel %vm844, %v834, %v837
      %v857 = vsel %vm847, %v843, 1326507024
      %v858 = vsel %vm846, %v840, %v857
      %v859 = vsel %vm845, %v856, %v858
      %v860 = vshll.u32 %v820, 8
      %v861 = vmul.u32.u64.compose %v860, %v859
      %v862 = vextract.low.u32 %v861
      %v863 = vextract.high.u32 %v861
      %v864 = vmul.u32.u64.compose %v860, %v855
      %v865 = vextract.low.u32 %v864
      %v866 = vextract.high.u32 %v864
      %v867 = vmul.u32 %v860, %v851
      %v868 = vadd.s32 %v863, %v865
      %vm869 = vc.u32 %v863, %v865
      %v870 = vadd.s32 %v866, 1
      %v871 = vsel %vm869, %v870, %v866
      %v872 = vadd.s32 %v867, %v871
      %v873 = vadd.s32 %v872, 536870912
      %v874 = vshrl.u32 %v873, 30
      %v875 = vshll.u32 %v874, 30
      %v876 = vsub.s32 %v872, %v875
      %vm877 = vcmp.lt.s32.totalorder %v876, 0
      %v878 = vsub.s32 0, %v876
      %v879 = vsel %vm877, %v878, %v876
      %v880 = vclz %v879
      %v881 = vsub.s32 %v880, 2
      %vm882 = vcmp.gt.s32.totalorder 0, %v881
      %v883 = vsel %vm882, 0, %v881
      %v884 = vsub.s32 32, %v883
      %v885 = vshll.u32 %v876, %v883
      %v886 = vshrl.u32 %v868, %v884
      %v887 = vor.u32 %v885, %v886
      %v888 = vsub.s32 4294967266, %v883
      %v889 = vadd.s32 %v888, 127
      %v890 = vshll.u32 %v889, 23
      %v891 = vor.u32 4788187, %v890
      %v892 = vand.u32 2147483647, %v891
      %v894 = vcvt.s32.f32 %v887
      %v895 = vmul.f32 %v894, %v892
      %v896 = vxor.u32 %v895, 2147483648
      %v897 = vsel %vm814, %v896, %v895
      %v898 = vsub.s32 4, %v874
      %v899 = vsel %vm814, %v898, %v874
      %v900 = vsel %vm813, %v289, %v897
      %v901 = vsel %vm813, 0, %v899
      %v902 = vcosq.f32.pop %v900
      %v903 = vsinq.f32.pop %v900
      %vm904 = vweird.f32 %v289
      %v905 = vadd.s32 %v901, 3
      %v906 = vand.u32 %v905, 3
      %vm907 = vcmp.lt.s32.totalorder %v906, 2
      %vm908 = vcmp.eq.s32.totalorder %v906, 0
      %v909 = vxor.u32 %v903, 2147483648
      %v910 = vsel %vm908, %v902, %v909
      %vm911 = vcmp.eq.s32.totalorder %v906, 2
      %v912 = vxor.u32 %v902, 2147483648
      %v913 = vsel %vm911, %v912, %v903
      %v914 = vsel %vm907, %v910, %v913
      %v915 = vsel %vm904, nan, %v914
      %v916 = vand.u32 2147483647, %v290
      %vm917 = vcmp.le.f32.partialorder %v916, 0.7853982
      %vm918 = vcmp.lt.s32.totalorder %v290, 0
      %v919 = vand.u32 %v290, 2139095040
      %v920 = vshrl.u32 %v919, 23
      %v921 = vsub.s32 %v920, 127
      %v922 = vand.u32 2147483647, %v290
      %v923 = vand.u32 %v922, 8388607
      %v924 = vor.u32 %v923, 8388608
      %v925 = vsub.s32 0, %v924
      %v926 = vadd.s32 %v921, 1
      %vm927 = vcmp.gt.s32.totalorder %v926, 0
      %v928 = vsel %vm927, %v926, 0
      %v929 = vshrl.u32 %v928, 5
      %v930 = vand.u32 %v928, 31
      %v931 = vsub.s32 32, %v930
      %v932 = vshrl.u32 683565275, %v931
      %v933 = vshll.u32 683565275, %v930
      %v934 = vshrl.u32 2475754826, %v931
      %v935 = vor.u32 %v933, %v934
      %v936 = vshll.u32 2475754826, %v930
      %v937 = vshrl.u32 2131351028, %v931
      %v938 = vor.u32 %v936, %v937
      %v939 = vshll.u32 2131351028, %v930
      %v940 = vshrl.u32 2102212464, %v931
      %v941 = vor.u32 %v939, %v940
      %v942 = vshll.u32 2102212464, %v930
      %v943 = vshrl.u32 920167782, %v931
      %v944 = vor.u32 %v942, %v943
      %v945 = vshll.u32 920167782, %v930
      %v946 = vshrl.u32 1326507024, %v931
      %v947 = vor.u32 %v945, %v946
      %vm948 = vcmp.lt.s32.totalorder %v929, 1
      %vm949 = vcmp.lt.s32.totalorder %v929, 2
      %vm950 = vcmp.lt.s32.totalorder %v929, 3
      %vm951 = vcmp.lt.s32.totalorder %v929, 4
      %v952 = vsel %vm948, %v932, %v935
      %v953 = vsel %vm951, %v941, 2102212464
      %v954 = vsel %vm950, %v938, %v953
      %v955 = vsel %vm949, %v952, %v954
      %v956 = vsel %vm948, %v935, %v938
      %v957 = vsel %vm951, %v944, 920167782
      %v958 = vsel %vm950, %v941, %v957
      %v959 = vsel %vm949, %v956, %v958
      %v960 = vsel %vm948, %v938, %v941
      %v961 = vsel %vm951, %v947, 1326507024
      %v962 = vsel %vm950, %v944, %v961
      %v963 = vsel %vm949, %v960, %v962
      %v964 = vshll.u32 %v924, 8
      %v965 = vmul.u32.u64.compose %v964, %v963
      %v966 = vextract.low.u32 %v965
      %v967 = vextract.high.u32 %v965
      %v968 = vmul.u32.u64.compose %v964, %v959
      %v969 = vextract.low.u32 %v968
      %v970 = vextract.high.u32 %v968
      %v971 = vmul.u32 %v964, %v955
      %v972 = vadd.s32 %v967, %v969
      %vm973 = vc.u32 %v967, %v969
      %v974 = vadd.s32 %v970, 1
      %v975 = vsel %vm973, %v974, %v970
      %v976 = vadd.s32 %v971, %v975
      %v977 = vadd.s32 %v976, 536870912
      %v978 = vshrl.u32 %v977, 30
      %v979 = vshll.u32 %v978, 30
      %v980 = vsub.s32 %v976, %v979
      %vm981 = vcmp.lt.s32.totalorder %v980, 0
      %v982 = vsub.s32 0, %v980
      %v983 = vsel %vm981, %v982, %v980
      %v984 = vclz %v983
      %v985 = vsub.s32 %v984, 2
      %vm986 = vcmp.gt.s32.totalorder 0, %v985
      %v987 = vsel %vm986, 0, %v985
      %v988 = vsub.s32 32, %v987
      %v989 = vshll.u32 %v980, %v987
      %v990 = vshrl.u32 %v972, %v988
      %v991 = vor.u32 %v989, %v990
      %v992 = vsub.s32 4294967266, %v987
      %v993 = vadd.s32 %v992, 127
      %v994 = vshll.u32 %v993, 23
      %v995 = vor.u32 4788187, %v994
      %v996 = vand.u32 2147483647, %v995
      %v998 = vcvt.s32.f32 %v991
      %v999 = vmul.f32 %v998, %v996
      %v1000 = vxor.u32 %v999, 2147483648
      %v1001 = vsel %vm918, %v1000, %v999
      %v1002 = vsub.s32 4, %v978
      %v1003 = vsel %vm918, %v1002, %v978
      %v1004 = vsel %vm917, %v290, %v1001
      %v1005 = vsel %vm917, 0, %v1003
      %v1006 = vcosq.f32.pop %v1004
      %v1007 = vsinq.f32.pop %v1004
      %vm1008 = vweird.f32 %v290
      %v1009 = vadd.s32 %v1005, 3
      %v1010 = vand.u32 %v1009, 3
      %vm1011 = vcmp.lt.s32.totalorder %v1010, 2
      %vm1012 = vcmp.eq.s32.totalorder %v1010, 0
      %v1013 = vxor.u32 %v1007, 2147483648
      %v1014 = vsel %vm1012, %v1006, %v1013
      %vm1015 = vcmp.eq.s32.totalorder %v1010, 2
      %v1016 = vxor.u32 %v1006, 2147483648
      %v1017 = vsel %vm1015, %v1016, %v1007
      %v1018 = vsel %vm1011, %v1014, %v1017
      %v1019 = vsel %vm1008, nan, %v1018
      %v1020 = vand.u32 2147483647, %v291
      %vm1021 = vcmp.le.f32.partialorder %v1020, 0.7853982
      %vm1022 = vcmp.lt.s32.totalorder %v291, 0
      %v1023 = vand.u32 %v291, 2139095040
      %v1024 = vshrl.u32 %v1023, 23
      %v1025 = vsub.s32 %v1024, 127
      %v1026 = vand.u32 2147483647, %v291
      %v1027 = vand.u32 %v1026, 8388607
      %v1028 = vor.u32 %v1027, 8388608
      %v1029 = vsub.s32 0, %v1028
      %v1030 = vadd.s32 %v1025, 1
      %vm1031 = vcmp.gt.s32.totalorder %v1030, 0
      %v1032 = vsel %vm1031, %v1030, 0
      %v1033 = vshrl.u32 %v1032, 5
      %v1034 = vand.u32 %v1032, 31
      %v1035 = vsub.s32 32, %v1034
      %v1036 = vshrl.u32 683565275, %v1035
      %v1037 = vshll.u32 683565275, %v1034
      %v1038 = vshrl.u32 2475754826, %v1035
      %v1039 = vor.u32 %v1037, %v1038
      %v1040 = vshll.u32 2475754826, %v1034
      %v1041 = vshrl.u32 2131351028, %v1035
      %v1042 = vor.u32 %v1040, %v1041
      %v1043 = vshll.u32 2131351028, %v1034
      %v1044 = vshrl.u32 2102212464, %v1035
      %v1045 = vor.u32 %v1043, %v1044
      %v1046 = vshll.u32 2102212464, %v1034
      %v1047 = vshrl.u32 920167782, %v1035
      %v1048 = vor.u32 %v1046, %v1047
      %v1049 = vshll.u32 920167782, %v1034
      %v1050 = vshrl.u32 1326507024, %v1035
      %v1051 = vor.u32 %v1049, %v1050
      %vm1052 = vcmp.lt.s32.totalorder %v1033, 1
      %vm1053 = vcmp.lt.s32.totalorder %v1033, 2
      %vm1054 = vcmp.lt.s32.totalorder %v1033, 3
      %vm1055 = vcmp.lt.s32.totalorder %v1033, 4
      %v1056 = vsel %vm1052, %v1036, %v1039
      %v1057 = vsel %vm1055, %v1045, 2102212464
      %v1058 = vsel %vm1054, %v1042, %v1057
      %v1059 = vsel %vm1053, %v1056, %v1058
      %v1060 = vsel %vm1052, %v1039, %v1042
      %v1061 = vsel %vm1055, %v1048, 920167782
      %v1062 = vsel %vm1054, %v1045, %v1061
      %v1063 = vsel %vm1053, %v1060, %v1062
      %v1064 = vsel %vm1052, %v1042, %v1045
      %v1065 = vsel %vm1055, %v1051, 1326507024
      %v1066 = vsel %vm1054, %v1048, %v1065
      %v1067 = vsel %vm1053, %v1064, %v1066
      %v1068 = vshll.u32 %v1028, 8
      %v1069 = vmul.u32.u64.compose %v1068, %v1067
      %v1070 = vextract.low.u32 %v1069
      %v1071 = vextract.high.u32 %v1069
      %v1072 = vmul.u32.u64.compose %v1068, %v1063
      %v1073 = vextract.low.u32 %v1072
      %v1074 = vextract.high.u32 %v1072
      %v1075 = vmul.u32 %v1068, %v1059
      %v1076 = vadd.s32 %v1071, %v1073
      %vm1077 = vc.u32 %v1071, %v1073
      %v1078 = vadd.s32 %v1074, 1
      %v1079 = vsel %vm1077, %v1078, %v1074
      %v1080 = vadd.s32 %v1075, %v1079
      %v1081 = vadd.s32 %v1080, 536870912
      %v1082 = vshrl.u32 %v1081, 30
      %v1083 = vshll.u32 %v1082, 30
      %v1084 = vsub.s32 %v1080, %v1083
      %vm1085 = vcmp.lt.s32.totalorder %v1084, 0
      %v1086 = vsub.s32 0, %v1084
      %v1087 = vsel %vm1085, %v1086, %v1084
      %v1088 = vclz %v1087
      %v1089 = vsub.s32 %v1088, 2
      %vm1090 = vcmp.gt.s32.totalorder 0, %v1089
      %v1091 = vsel %vm1090, 0, %v1089
      %v1092 = vsub.s32 32, %v1091
      %v1093 = vshll.u32 %v1084, %v1091
      %v1094 = vshrl.u32 %v1076, %v1092
      %v1095 = vor.u32 %v1093, %v1094
      %v1096 = vsub.s32 4294967266, %v1091
      %v1097 = vadd.s32 %v1096, 127
      %v1098 = vshll.u32 %v1097, 23
      %v1099 = vor.u32 4788187, %v1098
      %v1100 = vand.u32 2147483647, %v1099
      %v1102 = vcvt.s32.f32 %v1095
      %v1103 = vmul.f32 %v1102, %v1100
      %v1104 = vxor.u32 %v1103, 2147483648
      %v1105 = vsel %vm1022, %v1104, %v1103
      %v1106 = vsub.s32 4, %v1082
      %v1107 = vsel %vm1022, %v1106, %v1082
      %v1108 = vsel %vm1021, %v291, %v1105
      %v1109 = vsel %vm1021, 0, %v1107
      %v1110 = vcosq.f32.pop %v1108
      %v1111 = vsinq.f32.pop %v1108
      %vm1112 = vweird.f32 %v291
      %v1113 = vadd.s32 %v1109, 3
      %v1114 = vand.u32 %v1113, 3
      %vm1115 = vcmp.lt.s32.totalorder %v1114, 2
      %vm1116 = vcmp.eq.s32.totalorder %v1114, 0
      %v1117 = vxor.u32 %v1111, 2147483648
      %v1118 = vsel %vm1116, %v1110, %v1117
      %vm1119 = vcmp.eq.s32.totalorder %v1114, 2
      %v1120 = vxor.u32 %v1110, 2147483648
      %v1121 = vsel %vm1119, %v1120, %v1111
      %v1122 = vsel %vm1115, %v1118, %v1121
      %v1123 = vsel %vm1112, nan, %v1122
      %v1124 = vand.u32 2147483647, %v284
      %vm1125 = vcmp.le.f32.partialorder %v1124, 0.7853982
      %vm1126 = vcmp.lt.s32.totalorder %v284, 0
      %v1127 = vand.u32 %v284, 2139095040
      %v1128 = vshrl.u32 %v1127, 23
      %v1129 = vsub.s32 %v1128, 127
      %v1130 = vand.u32 2147483647, %v284
      %v1131 = vand.u32 %v1130, 8388607
      %v1132 = vor.u32 %v1131, 8388608
      %v1133 = vsub.s32 0, %v1132
      %v1134 = vadd.s32 %v1129, 1
      %vm1135 = vcmp.gt.s32.totalorder %v1134, 0
      %v1136 = vsel %vm1135, %v1134, 0
      %v1137 = vshrl.u32 %v1136, 5
      %v1138 = vand.u32 %v1136, 31
      %v1139 = vsub.s32 32, %v1138
      %v1140 = vshrl.u32 683565275, %v1139
      %v1141 = vshll.u32 683565275, %v1138
      %v1142 = vshrl.u32 2475754826, %v1139
      %v1143 = vor.u32 %v1141, %v1142
      %v1144 = vshll.u32 2475754826, %v1138
      %v1145 = vshrl.u32 2131351028, %v1139
      %v1146 = vor.u32 %v1144, %v1145
      %v1147 = vshll.u32 2131351028, %v1138
      %v1148 = vshrl.u32 2102212464, %v1139
      %v1149 = vor.u32 %v1147, %v1148
      %v1150 = vshll.u32 2102212464, %v1138
      %v1151 = vshrl.u32 920167782, %v1139
      %v1152 = vor.u32 %v1150, %v1151
      %v1153 = vshll.u32 920167782, %v1138
      %v1154 = vshrl.u32 1326507024, %v1139
      %v1155 = vor.u32 %v1153, %v1154
      %vm1156 = vcmp.lt.s32.totalorder %v1137, 1
      %vm1157 = vcmp.lt.s32.totalorder %v1137, 2
      %vm1158 = vcmp.lt.s32.totalorder %v1137, 3
      %vm1159 = vcmp.lt.s32.totalorder %v1137, 4
      %v1160 = vsel %vm1156, %v1140, %v1143
      %v1161 = vsel %vm1159, %v1149, 2102212464
      %v1162 = vsel %vm1158, %v1146, %v1161
      %v1163 = vsel %vm1157, %v1160, %v1162
      %v1164 = vsel %vm1156, %v1143, %v1146
      %v1165 = vsel %vm1159, %v1152, 920167782
      %v1166 = vsel %vm1158, %v1149, %v1165
      %v1167 = vsel %vm1157, %v1164, %v1166
      %v1168 = vsel %vm1156, %v1146, %v1149
      %v1169 = vsel %vm1159, %v1155, 1326507024
      %v1170 = vsel %vm1158, %v1152, %v1169
      %v1171 = vsel %vm1157, %v1168, %v1170
      %v1172 = vshll.u32 %v1132, 8
      %v1173 = vmul.u32.u64.compose %v1172, %v1171
      %v1174 = vextract.low.u32 %v1173
      %v1175 = vextract.high.u32 %v1173
      %v1176 = vmul.u32.u64.compose %v1172, %v1167
      %v1177 = vextract.low.u32 %v1176
      %v1178 = vextract.high.u32 %v1176
      %v1179 = vmul.u32 %v1172, %v1163
      %v1180 = vadd.s32 %v1175, %v1177
      %vm1181 = vc.u32 %v1175, %v1177
      %v1182 = vadd.s32 %v1178, 1
      %v1183 = vsel %vm1181, %v1182, %v1178
      %v1184 = vadd.s32 %v1179, %v1183
      %v1185 = vadd.s32 %v1184, 536870912
      %v1186 = vshrl.u32 %v1185, 30
      %v1187 = vshll.u32 %v1186, 30
      %v1188 = vsub.s32 %v1184, %v1187
      %vm1189 = vcmp.lt.s32.totalorder %v1188, 0
      %v1190 = vsub.s32 0, %v1188
      %v1191 = vsel %vm1189, %v1190, %v1188
      %v1192 = vclz %v1191
      %v1193 = vsub.s32 %v1192, 2
      %vm1194 = vcmp.gt.s32.totalorder 0, %v1193
      %v1195 = vsel %vm1194, 0, %v1193
      %v1196 = vsub.s32 32, %v1195
      %v1197 = vshll.u32 %v1188, %v1195
      %v1198 = vshrl.u32 %v1180, %v1196
      %v1199 = vor.u32 %v1197, %v1198
      %v1200 = vsub.s32 4294967266, %v1195
      %v1201 = vadd.s32 %v1200, 127
      %v1202 = vshll.u32 %v1201, 23
      %v1203 = vor.u32 4788187, %v1202
      %v1204 = vand.u32 2147483647, %v1203
      %v1206 = vcvt.s32.f32 %v1199
      %v1207 = vmul.f32 %v1206, %v1204
      %v1208 = vxor.u32 %v1207, 2147483648
      %v1209 = vsel %vm1126, %v1208, %v1207
      %v1210 = vsub.s32 4, %v1186
      %v1211 = vsel %vm1126, %v1210, %v1186
      %v1212 = vsel %vm1125, %v284, %v1209
      %v1213 = vsel %vm1125, 0, %v1211
      %v1214 = vcosq.f32.pop %v1212
      %v1215 = vsinq.f32.pop %v1212
      %vm1216 = vweird.f32 %v284
      %v1217 = vand.u32 %v1213, 3
      %vm1218 = vcmp.lt.s32.totalorder %v1217, 2
      %vm1219 = vcmp.eq.s32.totalorder %v1217, 0
      %v1220 = vxor.u32 %v1215, 2147483648
      %v1221 = vsel %vm1219, %v1214, %v1220
      %vm1222 = vcmp.eq.s32.totalorder %v1217, 2
      %v1223 = vxor.u32 %v1214, 2147483648
      %v1224 = vsel %vm1222, %v1223, %v1215
      %v1225 = vsel %vm1218, %v1221, %v1224
      %v1226 = vsel %vm1216, nan, %v1225
      %v1227 = vand.u32 2147483647, %v285
      %vm1228 = vcmp.le.f32.partialorder %v1227, 0.7853982
      %vm1229 = vcmp.lt.s32.totalorder %v285, 0
      %v1230 = vand.u32 %v285, 2139095040
      %v1231 = vshrl.u32 %v1230, 23
      %v1232 = vsub.s32 %v1231, 127
      %v1233 = vand.u32 2147483647, %v285
      %v1234 = vand.u32 %v1233, 8388607
      %v1235 = vor.u32 %v1234, 8388608
      %v1236 = vsub.s32 0, %v1235
      %v1237 = vadd.s32 %v1232, 1
      %vm1238 = vcmp.gt.s32.totalorder %v1237, 0
      %v1239 = vsel %vm1238, %v1237, 0
      %v1240 = vshrl.u32 %v1239, 5
      %v1241 = vand.u32 %v1239, 31
      %v1242 = vsub.s32 32, %v1241
      %v1243 = vshrl.u32 683565275, %v1242
      %v1244 = vshll.u32 683565275, %v1241
      %v1245 = vshrl.u32 2475754826, %v1242
      %v1246 = vor.u32 %v1244, %v1245
      %v1247 = vshll.u32 2475754826, %v1241
      %v1248 = vshrl.u32 2131351028, %v1242
      %v1249 = vor.u32 %v1247, %v1248
      %v1250 = vshll.u32 2131351028, %v1241
      %v1251 = vshrl.u32 2102212464, %v1242
      %v1252 = vor.u32 %v1250, %v1251
      %v1253 = vshll.u32 2102212464, %v1241
      %v1254 = vshrl.u32 920167782, %v1242
      %v1255 = vor.u32 %v1253, %v1254
      %v1256 = vshll.u32 920167782, %v1241
      %v1257 = vshrl.u32 1326507024, %v1242
      %v1258 = vor.u32 %v1256, %v1257
      %vm1259 = vcmp.lt.s32.totalorder %v1240, 1
      %vm1260 = vcmp.lt.s32.totalorder %v1240, 2
      %vm1261 = vcmp.lt.s32.totalorder %v1240, 3
      %vm1262 = vcmp.lt.s32.totalorder %v1240, 4
      %v1263 = vsel %vm1259, %v1243, %v1246
      %v1264 = vsel %vm1262, %v1252, 2102212464
      %v1265 = vsel %vm1261, %v1249, %v1264
      %v1266 = vsel %vm1260, %v1263, %v1265
      %v1267 = vsel %vm1259, %v1246, %v1249
      %v1268 = vsel %vm1262, %v1255, 920167782
      %v1269 = vsel %vm1261, %v1252, %v1268
      %v1270 = vsel %vm1260, %v1267, %v1269
      %v1271 = vsel %vm1259, %v1249, %v1252
      %v1272 = vsel %vm1262, %v1258, 1326507024
      %v1273 = vsel %vm1261, %v1255, %v1272
      %v1274 = vsel %vm1260, %v1271, %v1273
      %v1275 = vshll.u32 %v1235, 8
      %v1276 = vmul.u32.u64.compose %v1275, %v1274
      %v1277 = vextract.low.u32 %v1276
      %v1278 = vextract.high.u32 %v1276
      %v1279 = vmul.u32.u64.compose %v1275, %v1270
      %v1280 = vextract.low.u32 %v1279
      %v1281 = vextract.high.u32 %v1279
      %v1282 = vmul.u32 %v1275, %v1266
      %v1283 = vadd.s32 %v1278, %v1280
      %vm1284 = vc.u32 %v1278, %v1280
      %v1285 = vadd.s32 %v1281, 1
      %v1286 = vsel %vm1284, %v1285, %v1281
      %v1287 = vadd.s32 %v1282, %v1286
      %v1288 = vadd.s32 %v1287, 536870912
      %v1289 = vshrl.u32 %v1288, 30
      %v1290 = vshll.u32 %v1289, 30
      %v1291 = vsub.s32 %v1287, %v1290
      %vm1292 = vcmp.lt.s32.totalorder %v1291, 0
      %v1293 = vsub.s32 0, %v1291
      %v1294 = vsel %vm1292, %v1293, %v1291
      %v1295 = vclz %v1294
      %v1296 = vsub.s32 %v1295, 2
      %vm1297 = vcmp.gt.s32.totalorder 0, %v1296
      %v1298 = vsel %vm1297, 0, %v1296
      %v1299 = vsub.s32 32, %v1298
      %v1300 = vshll.u32 %v1291, %v1298
      %v1301 = vshrl.u32 %v1283, %v1299
      %v1302 = vor.u32 %v1300, %v1301
      %v1303 = vsub.s32 4294967266, %v1298
      %v1304 = vadd.s32 %v1303, 127
      %v1305 = vshll.u32 %v1304, 23
      %v1306 = vor.u32 4788187, %v1305
      %v1307 = vand.u32 2147483647, %v1306
      %v1309 = vcvt.s32.f32 %v1302
      %v1310 = vmul.f32 %v1309, %v1307
      %v1311 = vxor.u32 %v1310, 2147483648
      %v1312 = vsel %vm1229, %v1311, %v1310
      %v1313 = vsub.s32 4, %v1289
      %v1314 = vsel %vm1229, %v1313, %v1289
      %v1315 = vsel %vm1228, %v285, %v1312
      %v1316 = vsel %vm1228, 0, %v1314
      %v1317 = vcosq.f32.pop %v1315
      %v1318 = vsinq.f32.pop %v1315
      %vm1319 = vweird.f32 %v285
      %v1320 = vand.u32 %v1316, 3
      %vm1321 = vcmp.lt.s32.totalorder %v1320, 2
      %vm1322 = vcmp.eq.s32.totalorder %v1320, 0
      %v1323 = vxor.u32 %v1318, 2147483648
      %v1324 = vsel %vm1322, %v1317, %v1323
      %vm1325 = vcmp.eq.s32.totalorder %v1320, 2
      %v1326 = vxor.u32 %v1317, 2147483648
      %v1327 = vsel %vm1325, %v1326, %v1318
      %v1328 = vsel %vm1321, %v1324, %v1327
      %v1329 = vsel %vm1319, nan, %v1328
      %v1330 = vand.u32 2147483647, %v286
      %vm1331 = vcmp.le.f32.partialorder %v1330, 0.7853982
      %vm1332 = vcmp.lt.s32.totalorder %v286, 0
      %v1333 = vand.u32 %v286, 2139095040
      %v1334 = vshrl.u32 %v1333, 23
      %v1335 = vsub.s32 %v1334, 127
      %v1336 = vand.u32 2147483647, %v286
      %v1337 = vand.u32 %v1336, 8388607
      %v1338 = vor.u32 %v1337, 8388608
      %v1339 = vsub.s32 0, %v1338
      %v1340 = vadd.s32 %v1335, 1
      %vm1341 = vcmp.gt.s32.totalorder %v1340, 0
      %v1342 = vsel %vm1341, %v1340, 0
      %v1343 = vshrl.u32 %v1342, 5
      %v1344 = vand.u32 %v1342, 31
      %v1345 = vsub.s32 32, %v1344
      %v1346 = vshrl.u32 683565275, %v1345
      %v1347 = vshll.u32 683565275, %v1344
      %v1348 = vshrl.u32 2475754826, %v1345
      %v1349 = vor.u32 %v1347, %v1348
      %v1350 = vshll.u32 2475754826, %v1344
      %v1351 = vshrl.u32 2131351028, %v1345
      %v1352 = vor.u32 %v1350, %v1351
      %v1353 = vshll.u32 2131351028, %v1344
      %v1354 = vshrl.u32 2102212464, %v1345
      %v1355 = vor.u32 %v1353, %v1354
      %v1356 = vshll.u32 2102212464, %v1344
      %v1357 = vshrl.u32 920167782, %v1345
      %v1358 = vor.u32 %v1356, %v1357
      %v1359 = vshll.u32 920167782, %v1344
      %v1360 = vshrl.u32 1326507024, %v1345
      %v1361 = vor.u32 %v1359, %v1360
      %vm1362 = vcmp.lt.s32.totalorder %v1343, 1
      %vm1363 = vcmp.lt.s32.totalorder %v1343, 2
      %vm1364 = vcmp.lt.s32.totalorder %v1343, 3
      %vm1365 = vcmp.lt.s32.totalorder %v1343, 4
      %v1366 = vsel %vm1362, %v1346, %v1349
      %v1367 = vsel %vm1365, %v1355, 2102212464
      %v1368 = vsel %vm1364, %v1352, %v1367
      %v1369 = vsel %vm1363, %v1366, %v1368
      %v1370 = vsel %vm1362, %v1349, %v1352
      %v1371 = vsel %vm1365, %v1358, 920167782
      %v1372 = vsel %vm1364, %v1355, %v1371
      %v1373 = vsel %vm1363, %v1370, %v1372
      %v1374 = vsel %vm1362, %v1352, %v1355
      %v1375 = vsel %vm1365, %v1361, 1326507024
      %v1376 = vsel %vm1364, %v1358, %v1375
      %v1377 = vsel %vm1363, %v1374, %v1376
      %v1378 = vshll.u32 %v1338, 8
      %v1379 = vmul.u32.u64.compose %v1378, %v1377
      %v1380 = vextract.low.u32 %v1379
      %v1381 = vextract.high.u32 %v1379
      %v1382 = vmul.u32.u64.compose %v1378, %v1373
      %v1383 = vextract.low.u32 %v1382
      %v1384 = vextract.high.u32 %v1382
      %v1385 = vmul.u32 %v1378, %v1369
      %v1386 = vadd.s32 %v1381, %v1383
      %vm1387 = vc.u32 %v1381, %v1383
      %v1388 = vadd.s32 %v1384, 1
      %v1389 = vsel %vm1387, %v1388, %v1384
      %v1390 = vadd.s32 %v1385, %v1389
      %v1391 = vadd.s32 %v1390, 536870912
      %v1392 = vshrl.u32 %v1391, 30
      %v1393 = vshll.u32 %v1392, 30
      %v1394 = vsub.s32 %v1390, %v1393
      %vm1395 = vcmp.lt.s32.totalorder %v1394, 0
      %v1396 = vsub.s32 0, %v1394
      %v1397 = vsel %vm1395, %v1396, %v1394
      %v1398 = vclz %v1397
      %v1399 = vsub.s32 %v1398, 2
      %vm1400 = vcmp.gt.s32.totalorder 0, %v1399
      %v1401 = vsel %vm1400, 0, %v1399
      %v1402 = vsub.s32 32, %v1401
      %v1403 = vshll.u32 %v1394, %v1401
      %v1404 = vshrl.u32 %v1386, %v1402
      %v1405 = vor.u32 %v1403, %v1404
      %v1406 = vsub.s32 4294967266, %v1401
      %v1407 = vadd.s32 %v1406, 127
      %v1408 = vshll.u32 %v1407, 23
      %v1409 = vor.u32 4788187, %v1408
      %v1410 = vand.u32 2147483647, %v1409
      %v1412 = vcvt.s32.f32 %v1405
      %v1413 = vmul.f32 %v1412, %v1410
      %v1414 = vxor.u32 %v1413, 2147483648
      %v1415 = vsel %vm1332, %v1414, %v1413
      %v1416 = vsub.s32 4, %v1392
      %v1417 = vsel %vm1332, %v1416, %v1392
      %v1418 = vsel %vm1331, %v286, %v1415
      %v1419 = vsel %vm1331, 0, %v1417
      %v1420 = vcosq.f32.pop %v1418
      %v1421 = vsinq.f32.pop %v1418
      %vm1422 = vweird.f32 %v286
      %v1423 = vand.u32 %v1419, 3
      %vm1424 = vcmp.lt.s32.totalorder %v1423, 2
      %vm1425 = vcmp.eq.s32.totalorder %v1423, 0
      %v1426 = vxor.u32 %v1421, 2147483648
      %v1427 = vsel %vm1425, %v1420, %v1426
      %vm1428 = vcmp.eq.s32.totalorder %v1423, 2
      %v1429 = vxor.u32 %v1420, 2147483648
      %v1430 = vsel %vm1428, %v1429, %v1421
      %v1431 = vsel %vm1424, %v1427, %v1430
      %v1432 = vsel %vm1422, nan, %v1431
      %v1433 = vand.u32 2147483647, %v287
      %vm1434 = vcmp.le.f32.partialorder %v1433, 0.7853982
      %vm1435 = vcmp.lt.s32.totalorder %v287, 0
      %v1436 = vand.u32 %v287, 2139095040
      %v1437 = vshrl.u32 %v1436, 23
      %v1438 = vsub.s32 %v1437, 127
      %v1439 = vand.u32 2147483647, %v287
      %v1440 = vand.u32 %v1439, 8388607
      %v1441 = vor.u32 %v1440, 8388608
      %v1442 = vsub.s32 0, %v1441
      %v1443 = vadd.s32 %v1438, 1
      %vm1444 = vcmp.gt.s32.totalorder %v1443, 0
      %v1445 = vsel %vm1444, %v1443, 0
      %v1446 = vshrl.u32 %v1445, 5
      %v1447 = vand.u32 %v1445, 31
      %v1448 = vsub.s32 32, %v1447
      %v1449 = vshrl.u32 683565275, %v1448
      %v1450 = vshll.u32 683565275, %v1447
      %v1451 = vshrl.u32 2475754826, %v1448
      %v1452 = vor.u32 %v1450, %v1451
      %v1453 = vshll.u32 2475754826, %v1447
      %v1454 = vshrl.u32 2131351028, %v1448
      %v1455 = vor.u32 %v1453, %v1454
      %v1456 = vshll.u32 2131351028, %v1447
      %v1457 = vshrl.u32 2102212464, %v1448
      %v1458 = vor.u32 %v1456, %v1457
      %v1459 = vshll.u32 2102212464, %v1447
      %v1460 = vshrl.u32 920167782, %v1448
      %v1461 = vor.u32 %v1459, %v1460
      %v1462 = vshll.u32 920167782, %v1447
      %v1463 = vshrl.u32 1326507024, %v1448
      %v1464 = vor.u32 %v1462, %v1463
      %vm1465 = vcmp.lt.s32.totalorder %v1446, 1
      %vm1466 = vcmp.lt.s32.totalorder %v1446, 2
      %vm1467 = vcmp.lt.s32.totalorder %v1446, 3
      %vm1468 = vcmp.lt.s32.totalorder %v1446, 4
      %v1469 = vsel %vm1465, %v1449, %v1452
      %v1470 = vsel %vm1468, %v1458, 2102212464
      %v1471 = vsel %vm1467, %v1455, %v1470
      %v1472 = vsel %vm1466, %v1469, %v1471
      %v1473 = vsel %vm1465, %v1452, %v1455
      %v1474 = vsel %vm1468, %v1461, 920167782
      %v1475 = vsel %vm1467, %v1458, %v1474
      %v1476 = vsel %vm1466, %v1473, %v1475
      %v1477 = vsel %vm1465, %v1455, %v1458
      %v1478 = vsel %vm1468, %v1464, 1326507024
      %v1479 = vsel %vm1467, %v1461, %v1478
      %v1480 = vsel %vm1466, %v1477, %v1479
      %v1481 = vshll.u32 %v1441, 8
      %v1482 = vmul.u32.u64.compose %v1481, %v1480
      %v1483 = vextract.low.u32 %v1482
      %v1484 = vextract.high.u32 %v1482
      %v1485 = vmul.u32.u64.compose %v1481, %v1476
      %v1486 = vextract.low.u32 %v1485
      %v1487 = vextract.high.u32 %v1485
      %v1488 = vmul.u32 %v1481, %v1472
      %v1489 = vadd.s32 %v1484, %v1486
      %vm1490 = vc.u32 %v1484, %v1486
      %v1491 = vadd.s32 %v1487, 1
      %v1492 = vsel %vm1490, %v1491, %v1487
      %v1493 = vadd.s32 %v1488, %v1492
      %v1494 = vadd.s32 %v1493, 536870912
      %v1495 = vshrl.u32 %v1494, 30
      %v1496 = vshll.u32 %v1495, 30
      %v1497 = vsub.s32 %v1493, %v1496
      %vm1498 = vcmp.lt.s32.totalorder %v1497, 0
      %v1499 = vsub.s32 0, %v1497
      %v1500 = vsel %vm1498, %v1499, %v1497
      %v1501 = vclz %v1500
      %v1502 = vsub.s32 %v1501, 2
      %vm1503 = vcmp.gt.s32.totalorder 0, %v1502
      %v1504 = vsel %vm1503, 0, %v1502
      %v1505 = vsub.s32 32, %v1504
      %v1506 = vshll.u32 %v1497, %v1504
      %v1507 = vshrl.u32 %v1489, %v1505
      %v1508 = vor.u32 %v1506, %v1507
      %v1509 = vsub.s32 4294967266, %v1504
      %v1510 = vadd.s32 %v1509, 127
      %v1511 = vshll.u32 %v1510, 23
      %v1512 = vor.u32 4788187, %v1511
      %v1513 = vand.u32 2147483647, %v1512
      %v1515 = vcvt.s32.f32 %v1508
      %v1516 = vmul.f32 %v1515, %v1513
      %v1517 = vxor.u32 %v1516, 2147483648
      %v1518 = vsel %vm1435, %v1517, %v1516
      %v1519 = vsub.s32 4, %v1495
      %v1520 = vsel %vm1435, %v1519, %v1495
      %v1521 = vsel %vm1434, %v287, %v1518
      %v1522 = vsel %vm1434, 0, %v1520
      %v1523 = vcosq.f32.pop %v1521
      %v1524 = vsinq.f32.pop %v1521
      %vm1525 = vweird.f32 %v287
      %v1526 = vand.u32 %v1522, 3
      %vm1527 = vcmp.lt.s32.totalorder %v1526, 2
      %vm1528 = vcmp.eq.s32.totalorder %v1526, 0
      %v1529 = vxor.u32 %v1524, 2147483648
      %v1530 = vsel %vm1528, %v1523, %v1529
      %vm1531 = vcmp.eq.s32.totalorder %v1526, 2
      %v1532 = vxor.u32 %v1523, 2147483648
      %v1533 = vsel %vm1531, %v1532, %v1524
      %v1534 = vsel %vm1527, %v1530, %v1533
      %v1535 = vsel %vm1525, nan, %v1534
      %v1536 = vand.u32 2147483647, %v288
      %vm1537 = vcmp.le.f32.partialorder %v1536, 0.7853982
      %vm1538 = vcmp.lt.s32.totalorder %v288, 0
      %v1539 = vand.u32 %v288, 2139095040
      %v1540 = vshrl.u32 %v1539, 23
      %v1541 = vsub.s32 %v1540, 127
      %v1542 = vand.u32 2147483647, %v288
      %v1543 = vand.u32 %v1542, 8388607
      %v1544 = vor.u32 %v1543, 8388608
      %v1545 = vsub.s32 0, %v1544
      %v1546 = vadd.s32 %v1541, 1
      %vm1547 = vcmp.gt.s32.totalorder %v1546, 0
      %v1548 = vsel %vm1547, %v1546, 0
      %v1549 = vshrl.u32 %v1548, 5
      %v1550 = vand.u32 %v1548, 31
      %v1551 = vsub.s32 32, %v1550
      %v1552 = vshrl.u32 683565275, %v1551
      %v1553 = vshll.u32 683565275, %v1550
      %v1554 = vshrl.u32 2475754826, %v1551
      %v1555 = vor.u32 %v1553, %v1554
      %v1556 = vshll.u32 2475754826, %v1550
      %v1557 = vshrl.u32 2131351028, %v1551
      %v1558 = vor.u32 %v1556, %v1557
      %v1559 = vshll.u32 2131351028, %v1550
      %v1560 = vshrl.u32 2102212464, %v1551
      %v1561 = vor.u32 %v1559, %v1560
      %v1562 = vshll.u32 2102212464, %v1550
      %v1563 = vshrl.u32 920167782, %v1551
      %v1564 = vor.u32 %v1562, %v1563
      %v1565 = vshll.u32 920167782, %v1550
      %v1566 = vshrl.u32 1326507024, %v1551
      %v1567 = vor.u32 %v1565, %v1566
      %vm1568 = vcmp.lt.s32.totalorder %v1549, 1
      %vm1569 = vcmp.lt.s32.totalorder %v1549, 2
      %vm1570 = vcmp.lt.s32.totalorder %v1549, 3
      %vm1571 = vcmp.lt.s32.totalorder %v1549, 4
      %v1572 = vsel %vm1568, %v1552, %v1555
      %v1573 = vsel %vm1571, %v1561, 2102212464
      %v1574 = vsel %vm1570, %v1558, %v1573
      %v1575 = vsel %vm1569, %v1572, %v1574
      %v1576 = vsel %vm1568, %v1555, %v1558
      %v1577 = vsel %vm1571, %v1564, 920167782
      %v1578 = vsel %vm1570, %v1561, %v1577
      %v1579 = vsel %vm1569, %v1576, %v1578
      %v1580 = vsel %vm1568, %v1558, %v1561
      %v1581 = vsel %vm1571, %v1567, 1326507024
      %v1582 = vsel %vm1570, %v1564, %v1581
      %v1583 = vsel %vm1569, %v1580, %v1582
      %v1584 = vshll.u32 %v1544, 8
      %v1585 = vmul.u32.u64.compose %v1584, %v1583
      %v1586 = vextract.low.u32 %v1585
      %v1587 = vextract.high.u32 %v1585
      %v1588 = vmul.u32.u64.compose %v1584, %v1579
      %v1589 = vextract.low.u32 %v1588
      %v1590 = vextract.high.u32 %v1588
      %v1591 = vmul.u32 %v1584, %v1575
      %v1592 = vadd.s32 %v1587, %v1589
      %vm1593 = vc.u32 %v1587, %v1589
      %v1594 = vadd.s32 %v1590, 1
      %v1595 = vsel %vm1593, %v1594, %v1590
      %v1596 = vadd.s32 %v1591, %v1595
      %v1597 = vadd.s32 %v1596, 536870912
      %v1598 = vshrl.u32 %v1597, 30
      %v1599 = vshll.u32 %v1598, 30
      %v1600 = vsub.s32 %v1596, %v1599
      %vm1601 = vcmp.lt.s32.totalorder %v1600, 0
      %v1602 = vsub.s32 0, %v1600
      %v1603 = vsel %vm1601, %v1602, %v1600
      %v1604 = vclz %v1603
      %v1605 = vsub.s32 %v1604, 2
      %vm1606 = vcmp.gt.s32.totalorder 0, %v1605
      %v1607 = vsel %vm1606, 0, %v1605
      %v1608 = vsub.s32 32, %v1607
      %v1609 = vshll.u32 %v1600, %v1607
      %v1610 = vshrl.u32 %v1592, %v1608
      %v1611 = vor.u32 %v1609, %v1610
      %v1612 = vsub.s32 4294967266, %v1607
      %v1613 = vadd.s32 %v1612, 127
      %v1614 = vshll.u32 %v1613, 23
      %v1615 = vor.u32 4788187, %v1614
      %v1616 = vand.u32 2147483647, %v1615
      %v1618 = vcvt.s32.f32 %v1611
      %v1619 = vmul.f32 %v1618, %v1616
      %v1620 = vxor.u32 %v1619, 2147483648
      %v1621 = vsel %vm1538, %v1620, %v1619
      %v1622 = vsub.s32 4, %v1598
      %v1623 = vsel %vm1538, %v1622, %v1598
      %v1624 = vsel %vm1537, %v288, %v1621
      %v1625 = vsel %vm1537, 0, %v1623
      %v1626 = vcosq.f32.pop %v1624
      %v1627 = vsinq.f32.pop %v1624
      %vm1628 = vweird.f32 %v288
      %v1629 = vand.u32 %v1625, 3
      %vm1630 = vcmp.lt.s32.totalorder %v1629, 2
      %vm1631 = vcmp.eq.s32.totalorder %v1629, 0
      %v1632 = vxor.u32 %v1627, 2147483648
      %v1633 = vsel %vm1631, %v1626, %v1632
      %vm1634 = vcmp.eq.s32.totalorder %v1629, 2
      %v1635 = vxor.u32 %v1626, 2147483648
      %v1636 = vsel %vm1634, %v1635, %v1627
      %v1637 = vsel %vm1630, %v1633, %v1636
      %v1638 = vsel %vm1628, nan, %v1637
      %v1639 = vand.u32 2147483647, %v289
      %vm1640 = vcmp.le.f32.partialorder %v1639, 0.7853982
      %vm1641 = vcmp.lt.s32.totalorder %v289, 0
      %v1642 = vand.u32 %v289, 2139095040
      %v1643 = vshrl.u32 %v1642, 23
      %v1644 = vsub.s32 %v1643, 127
      %v1645 = vand.u32 2147483647, %v289
      %v1646 = vand.u32 %v1645, 8388607
      %v1647 = vor.u32 %v1646, 8388608
      %v1648 = vsub.s32 0, %v1647
      %v1649 = vadd.s32 %v1644, 1
      %vm1650 = vcmp.gt.s32.totalorder %v1649, 0
      %v1651 = vsel %vm1650, %v1649, 0
      %v1652 = vshrl.u32 %v1651, 5
      %v1653 = vand.u32 %v1651, 31
      %v1654 = vsub.s32 32, %v1653
      %v1655 = vshrl.u32 683565275, %v1654
      %v1656 = vshll.u32 683565275, %v1653
      %v1657 = vshrl.u32 2475754826, %v1654
      %v1658 = vor.u32 %v1656, %v1657
      %v1659 = vshll.u32 2475754826, %v1653
      %v1660 = vshrl.u32 2131351028, %v1654
      %v1661 = vor.u32 %v1659, %v1660
      %v1662 = vshll.u32 2131351028, %v1653
      %v1663 = vshrl.u32 2102212464, %v1654
      %v1664 = vor.u32 %v1662, %v1663
      %v1665 = vshll.u32 2102212464, %v1653
      %v1666 = vshrl.u32 920167782, %v1654
      %v1667 = vor.u32 %v1665, %v1666
      %v1668 = vshll.u32 920167782, %v1653
      %v1669 = vshrl.u32 1326507024, %v1654
      %v1670 = vor.u32 %v1668, %v1669
      %vm1671 = vcmp.lt.s32.totalorder %v1652, 1
      %vm1672 = vcmp.lt.s32.totalorder %v1652, 2
      %vm1673 = vcmp.lt.s32.totalorder %v1652, 3
      %vm1674 = vcmp.lt.s32.totalorder %v1652, 4
      %v1675 = vsel %vm1671, %v1655, %v1658
      %v1676 = vsel %vm1674, %v1664, 2102212464
      %v1677 = vsel %vm1673, %v1661, %v1676
      %v1678 = vsel %vm1672, %v1675, %v1677
      %v1679 = vsel %vm1671, %v1658, %v1661
      %v1680 = vsel %vm1674, %v1667, 920167782
      %v1681 = vsel %vm1673, %v1664, %v1680
      %v1682 = vsel %vm1672, %v1679, %v1681
      %v1683 = vsel %vm1671, %v1661, %v1664
      %v1684 = vsel %vm1674, %v1670, 1326507024
      %v1685 = vsel %vm1673, %v1667, %v1684
      %v1686 = vsel %vm1672, %v1683, %v1685
      %v1687 = vshll.u32 %v1647, 8
      %v1688 = vmul.u32.u64.compose %v1687, %v1686
      %v1689 = vextract.low.u32 %v1688
      %v1690 = vextract.high.u32 %v1688
      %v1691 = vmul.u32.u64.compose %v1687, %v1682
      %v1692 = vextract.low.u32 %v1691
      %v1693 = vextract.high.u32 %v1691
      %v1694 = vmul.u32 %v1687, %v1678
      %v1695 = vadd.s32 %v1690, %v1692
      %vm1696 = vc.u32 %v1690, %v1692
      %v1697 = vadd.s32 %v1693, 1
      %v1698 = vsel %vm1696, %v1697, %v1693
      %v1699 = vadd.s32 %v1694, %v1698
      %v1700 = vadd.s32 %v1699, 536870912
      %v1701 = vshrl.u32 %v1700, 30
      %v1702 = vshll.u32 %v1701, 30
      %v1703 = vsub.s32 %v1699, %v1702
      %vm1704 = vcmp.lt.s32.totalorder %v1703, 0
      %v1705 = vsub.s32 0, %v1703
      %v1706 = vsel %vm1704, %v1705, %v1703
      %v1707 = vclz %v1706
      %v1708 = vsub.s32 %v1707, 2
      %vm1709 = vcmp.gt.s32.totalorder 0, %v1708
      %v1710 = vsel %vm1709, 0, %v1708
      %v1711 = vsub.s32 32, %v1710
      %v1712 = vshll.u32 %v1703, %v1710
      %v1713 = vshrl.u32 %v1695, %v1711
      %v1714 = vor.u32 %v1712, %v1713
      %v1715 = vsub.s32 4294967266, %v1710
      %v1716 = vadd.s32 %v1715, 127
      %v1717 = vshll.u32 %v1716, 23
      %v1718 = vor.u32 4788187, %v1717
      %v1719 = vand.u32 2147483647, %v1718
      %v1721 = vcvt.s32.f32 %v1714
      %v1722 = vmul.f32 %v1721, %v1719
      %v1723 = vxor.u32 %v1722, 2147483648
      %v1724 = vsel %vm1641, %v1723, %v1722
      %v1725 = vsub.s32 4, %v1701
      %v1726 = vsel %vm1641, %v1725, %v1701
      %v1727 = vsel %vm1640, %v289, %v1724
      %v1728 = vsel %vm1640, 0, %v1726
      %v1729 = vcosq.f32.pop %v1727
      %v1730 = vsinq.f32.pop %v1727
      %vm1731 = vweird.f32 %v289
      %v1732 = vand.u32 %v1728, 3
      %vm1733 = vcmp.lt.s32.totalorder %v1732, 2
      %vm1734 = vcmp.eq.s32.totalorder %v1732, 0
      %v1735 = vxor.u32 %v1730, 2147483648
      %v1736 = vsel %vm1734, %v1729, %v1735
      %vm1737 = vcmp.eq.s32.totalorder %v1732, 2
      %v1738 = vxor.u32 %v1729, 2147483648
      %v1739 = vsel %vm1737, %v1738, %v1730
      %v1740 = vsel %vm1733, %v1736, %v1739
      %v1741 = vsel %vm1731, nan, %v1740
      %v1742 = vand.u32 2147483647, %v290
      %vm1743 = vcmp.le.f32.partialorder %v1742, 0.7853982
      %vm1744 = vcmp.lt.s32.totalorder %v290, 0
      %v1745 = vand.u32 %v290, 2139095040
      %v1746 = vshrl.u32 %v1745, 23
      %v1747 = vsub.s32 %v1746, 127
      %v1748 = vand.u32 2147483647, %v290
      %v1749 = vand.u32 %v1748, 8388607
      %v1750 = vor.u32 %v1749, 8388608
      %v1751 = vsub.s32 0, %v1750
      %v1752 = vadd.s32 %v1747, 1
      %vm1753 = vcmp.gt.s32.totalorder %v1752, 0
      %v1754 = vsel %vm1753, %v1752, 0
      %v1755 = vshrl.u32 %v1754, 5
      %v1756 = vand.u32 %v1754, 31
      %v1757 = vsub.s32 32, %v1756
      %v1758 = vshrl.u32 683565275, %v1757
      %v1759 = vshll.u32 683565275, %v1756
      %v1760 = vshrl.u32 2475754826, %v1757
      %v1761 = vor.u32 %v1759, %v1760
      %v1762 = vshll.u32 2475754826, %v1756
      %v1763 = vshrl.u32 2131351028, %v1757
      %v1764 = vor.u32 %v1762, %v1763
      %v1765 = vshll.u32 2131351028, %v1756
      %v1766 = vshrl.u32 2102212464, %v1757
      %v1767 = vor.u32 %v1765, %v1766
      %v1768 = vshll.u32 2102212464, %v1756
      %v1769 = vshrl.u32 920167782, %v1757
      %v1770 = vor.u32 %v1768, %v1769
      %v1771 = vshll.u32 920167782, %v1756
      %v1772 = vshrl.u32 1326507024, %v1757
      %v1773 = vor.u32 %v1771, %v1772
      %vm1774 = vcmp.lt.s32.totalorder %v1755, 1
      %vm1775 = vcmp.lt.s32.totalorder %v1755, 2
      %vm1776 = vcmp.lt.s32.totalorder %v1755, 3
      %vm1777 = vcmp.lt.s32.totalorder %v1755, 4
      %v1778 = vsel %vm1774, %v1758, %v1761
      %v1779 = vsel %vm1777, %v1767, 2102212464
      %v1780 = vsel %vm1776, %v1764, %v1779
      %v1781 = vsel %vm1775, %v1778, %v1780
      %v1782 = vsel %vm1774, %v1761, %v1764
      %v1783 = vsel %vm1777, %v1770, 920167782
      %v1784 = vsel %vm1776, %v1767, %v1783
      %v1785 = vsel %vm1775, %v1782, %v1784
      %v1786 = vsel %vm1774, %v1764, %v1767
      %v1787 = vsel %vm1777, %v1773, 1326507024
      %v1788 = vsel %vm1776, %v1770, %v1787
      %v1789 = vsel %vm1775, %v1786, %v1788
      %v1790 = vshll.u32 %v1750, 8
      %v1791 = vmul.u32.u64.compose %v1790, %v1789
      %v1792 = vextract.low.u32 %v1791
      %v1793 = vextract.high.u32 %v1791
      %v1794 = vmul.u32.u64.compose %v1790, %v1785
      %v1795 = vextract.low.u32 %v1794
      %v1796 = vextract.high.u32 %v1794
      %v1797 = vmul.u32 %v1790, %v1781
      %v1798 = vadd.s32 %v1793, %v1795
      %vm1799 = vc.u32 %v1793, %v1795
      %v1800 = vadd.s32 %v1796, 1
      %v1801 = vsel %vm1799, %v1800, %v1796
      %v1802 = vadd.s32 %v1797, %v1801
      %v1803 = vadd.s32 %v1802, 536870912
      %v1804 = vshrl.u32 %v1803, 30
      %v1805 = vshll.u32 %v1804, 30
      %v1806 = vsub.s32 %v1802, %v1805
      %vm1807 = vcmp.lt.s32.totalorder %v1806, 0
      %v1808 = vsub.s32 0, %v1806
      %v1809 = vsel %vm1807, %v1808, %v1806
      %v1810 = vclz %v1809
      %v1811 = vsub.s32 %v1810, 2
      %vm1812 = vcmp.gt.s32.totalorder 0, %v1811
      %v1813 = vsel %vm1812, 0, %v1811
      %v1814 = vsub.s32 32, %v1813
      %v1815 = vshll.u32 %v1806, %v1813
      %v1816 = vshrl.u32 %v1798, %v1814
      %v1817 = vor.u32 %v1815, %v1816
      %v1818 = vsub.s32 4294967266, %v1813
      %v1819 = vadd.s32 %v1818, 127
      %v1820 = vshll.u32 %v1819, 23
      %v1821 = vor.u32 4788187, %v1820
      %v1822 = vand.u32 2147483647, %v1821
      %v1824 = vcvt.s32.f32 %v1817
      %v1825 = vmul.f32 %v1824, %v1822
      %v1826 = vxor.u32 %v1825, 2147483648
      %v1827 = vsel %vm1744, %v1826, %v1825
      %v1828 = vsub.s32 4, %v1804
      %v1829 = vsel %vm1744, %v1828, %v1804
      %v1830 = vsel %vm1743, %v290, %v1827
      %v1831 = vsel %vm1743, 0, %v1829
      %v1832 = vcosq.f32.pop %v1830
      %v1833 = vsinq.f32.pop %v1830
      %vm1834 = vweird.f32 %v290
      %v1835 = vand.u32 %v1831, 3
      %vm1836 = vcmp.lt.s32.totalorder %v1835, 2
      %vm1837 = vcmp.eq.s32.totalorder %v1835, 0
      %v1838 = vxor.u32 %v1833, 2147483648
      %v1839 = vsel %vm1837, %v1832, %v1838
      %vm1840 = vcmp.eq.s32.totalorder %v1835, 2
      %v1841 = vxor.u32 %v1832, 2147483648
      %v1842 = vsel %vm1840, %v1841, %v1833
      %v1843 = vsel %vm1836, %v1839, %v1842
      %v1844 = vsel %vm1834, nan, %v1843
      %v1845 = vand.u32 2147483647, %v291
      %vm1846 = vcmp.le.f32.partialorder %v1845, 0.7853982
      %vm1847 = vcmp.lt.s32.totalorder %v291, 0
      %v1848 = vand.u32 %v291, 2139095040
      %v1849 = vshrl.u32 %v1848, 23
      %v1850 = vsub.s32 %v1849, 127
      %v1851 = vand.u32 2147483647, %v291
      %v1852 = vand.u32 %v1851, 8388607
      %v1853 = vor.u32 %v1852, 8388608
      %v1854 = vsub.s32 0, %v1853
      %v1855 = vadd.s32 %v1850, 1
      %vm1856 = vcmp.gt.s32.totalorder %v1855, 0
      %v1857 = vsel %vm1856, %v1855, 0
      %v1858 = vshrl.u32 %v1857, 5
      %v1859 = vand.u32 %v1857, 31
      %v1860 = vsub.s32 32, %v1859
      %v1861 = vshrl.u32 683565275, %v1860
      %v1862 = vshll.u32 683565275, %v1859
      %v1863 = vshrl.u32 2475754826, %v1860
      %v1864 = vor.u32 %v1862, %v1863
      %v1865 = vshll.u32 2475754826, %v1859
      %v1866 = vshrl.u32 2131351028, %v1860
      %v1867 = vor.u32 %v1865, %v1866
      %v1868 = vshll.u32 2131351028, %v1859
      %v1869 = vshrl.u32 2102212464, %v1860
      %v1870 = vor.u32 %v1868, %v1869
      %v1871 = vshll.u32 2102212464, %v1859
      %v1872 = vshrl.u32 920167782, %v1860
      %v1873 = vor.u32 %v1871, %v1872
      %v1874 = vshll.u32 920167782, %v1859
      %v1875 = vshrl.u32 1326507024, %v1860
      %v1876 = vor.u32 %v1874, %v1875
      %vm1877 = vcmp.lt.s32.totalorder %v1858, 1
      %vm1878 = vcmp.lt.s32.totalorder %v1858, 2
      %vm1879 = vcmp.lt.s32.totalorder %v1858, 3
      %vm1880 = vcmp.lt.s32.totalorder %v1858, 4
      %v1881 = vsel %vm1877, %v1861, %v1864
      %v1882 = vsel %vm1880, %v1870, 2102212464
      %v1883 = vsel %vm1879, %v1867, %v1882
      %v1884 = vsel %vm1878, %v1881, %v1883
      %v1885 = vsel %vm1877, %v1864, %v1867
      %v1886 = vsel %vm1880, %v1873, 920167782
      %v1887 = vsel %vm1879, %v1870, %v1886
      %v1888 = vsel %vm1878, %v1885, %v1887
      %v1889 = vsel %vm1877, %v1867, %v1870
      %v1890 = vsel %vm1880, %v1876, 1326507024
      %v1891 = vsel %vm1879, %v1873, %v1890
      %v1892 = vsel %vm1878, %v1889, %v1891
      %v1893 = vshll.u32 %v1853, 8
      %v1894 = vmul.u32.u64.compose %v1893, %v1892
      %v1895 = vextract.low.u32 %v1894
      %v1896 = vextract.high.u32 %v1894
      %v1897 = vmul.u32.u64.compose %v1893, %v1888
      %v1898 = vextract.low.u32 %v1897
      %v1899 = vextract.high.u32 %v1897
      %v1900 = vmul.u32 %v1893, %v1884
      %v1901 = vadd.s32 %v1896, %v1898
      %vm1902 = vc.u32 %v1896, %v1898
      %v1903 = vadd.s32 %v1899, 1
      %v1904 = vsel %vm1902, %v1903, %v1899
      %v1905 = vadd.s32 %v1900, %v1904
      %v1906 = vadd.s32 %v1905, 536870912
      %v1907 = vshrl.u32 %v1906, 30
      %v1908 = vshll.u32 %v1907, 30
      %v1909 = vsub.s32 %v1905, %v1908
      %vm1910 = vcmp.lt.s32.totalorder %v1909, 0
      %v1911 = vsub.s32 0, %v1909
      %v1912 = vsel %vm1910, %v1911, %v1909
      %v1913 = vclz %v1912
      %v1914 = vsub.s32 %v1913, 2
      %vm1915 = vcmp.gt.s32.totalorder 0, %v1914
      %v1916 = vsel %vm1915, 0, %v1914
      %v1917 = vsub.s32 32, %v1916
      %v1918 = vshll.u32 %v1909, %v1916
      %v1919 = vshrl.u32 %v1901, %v1917
      %v1920 = vor.u32 %v1918, %v1919
      %v1921 = vsub.s32 4294967266, %v1916
      %v1922 = vadd.s32 %v1921, 127
      %v1923 = vshll.u32 %v1922, 23
      %v1924 = vor.u32 4788187, %v1923
      %v1925 = vand.u32 2147483647, %v1924
      %v1927 = vcvt.s32.f32 %v1920
      %v1928 = vmul.f32 %v1927, %v1925
      %v1929 = vxor.u32 %v1928, 2147483648
      %v1930 = vsel %vm1847, %v1929, %v1928
      %v1931 = vsub.s32 4, %v1907
      %v1932 = vsel %vm1847, %v1931, %v1907
      %v1933 = vsel %vm1846, %v291, %v1930
      %v1934 = vsel %vm1846, 0, %v1932
      %v1935 = vcosq.f32.pop %v1933
      %v1936 = vsinq.f32.pop %v1933
      %vm1937 = vweird.f32 %v291
      %v1938 = vand.u32 %v1934, 3
      %vm1939 = vcmp.lt.s32.totalorder %v1938, 2
      %vm1940 = vcmp.eq.s32.totalorder %v1938, 0
      %v1941 = vxor.u32 %v1936, 2147483648
      %v1942 = vsel %vm1940, %v1935, %v1941
      %vm1943 = vcmp.eq.s32.totalorder %v1938, 2
      %v1944 = vxor.u32 %v1935, 2147483648
      %v1945 = vsel %vm1943, %v1944, %v1936
      %v1946 = vsel %vm1939, %v1942, %v1945
      %v1947 = vsel %vm1937, nan, %v1946
      %1956 = vrot.lane.b32.xlu0 %v395, 3
      %v1957 = vpop.permute.xlu0 %1956
      %1958 = vrot.lane.b32.xlu0 %v499, 3
      %v1959 = vpop.permute.xlu0 %1958
      %1960 = vrot.lane.b32.xlu0 %v603, 3
      %v1961 = vpop.permute.xlu0 %1960
      %1962 = vrot.lane.b32.xlu0 %v707, 3
      %v1963 = vpop.permute.xlu0 %1962
      %1964 = vrot.lane.b32.xlu0 %v811, 3
      %v1965 = vpop.permute.xlu0 %1964
      %1966 = vrot.lane.b32.xlu0 %v915, 3
      %v1967 = vpop.permute.xlu0 %1966
      %1968 = vrot.lane.b32.xlu0 %v1019, 3
      %v1969 = vpop.permute.xlu0 %1968
      %1970 = vrot.lane.b32.xlu0 %v1123, 3
      %v1971 = vpop.permute.xlu0 %1970
      %1988 = vrot.lane.b32.xlu0 %v1226, 27
      %v1989 = vpop.permute.xlu0 %1988
      %1990 = vrot.lane.b32.xlu0 %v1329, 27
      %v1991 = vpop.permute.xlu0 %1990
      %1992 = vrot.lane.b32.xlu0 %v1432, 27
      %v1993 = vpop.permute.xlu0 %1992
      %1994 = vrot.lane.b32.xlu0 %v1535, 27
      %v1995 = vpop.permute.xlu0 %1994
      %1996 = vrot.lane.b32.xlu0 %v1638, 27
      %v1997 = vpop.permute.xlu0 %1996
      %1998 = vrot.lane.b32.xlu0 %v1741, 27
      %v1999 = vpop.permute.xlu0 %1998
      %2000 = vrot.lane.b32.xlu0 %v1844, 27
      %v2001 = vpop.permute.xlu0 %2000
      %2002 = vrot.lane.b32.xlu0 %v1947, 27
      %v2003 = vpop.permute.xlu0 %2002
      %vm2012 = vcmask 23552
      %v2013 = vsel %vm2012, %v147, %v1957
      %v2014 = vsel %vm2012, %v148, %v1959
      %v2015 = vsel %vm2012, %v149, %v1961
      %v2016 = vsel %vm2012, %v150, %v1963
      %v2017 = vsel %vm2012, %v151, %v1965
      %v2018 = vsel %vm2012, %v152, %v1967
      %v2019 = vsel %vm2012, %v153, %v1969
      %v2020 = vsel %vm2012, %v154, %v1971
      %vm2021 = vcmask 220160
      %v2022 = vsel %vm2021, %v2013, %v1989
      %v2023 = vsel %vm2021, %v2014, %v1991
      %v2024 = vsel %vm2021, %v2015, %v1993
      %v2025 = vsel %vm2021, %v2016, %v1995
      %v2026 = vsel %vm2021, %v2017, %v1997
      %v2027 = vsel %vm2021, %v2018, %v1999
      %v2028 = vsel %vm2021, %v2019, %v2001
      %v2029 = vsel %vm2021, %v2020, %v2003
      %vm2030 = vcmask 416768
      %2031 = vst.msk [vmem:[%s145] sm:$0xff] %vm2030, %v2022
      %2032 = vst.msk [vmem:[%s145 + $0x8] sm:$0xff] %vm2030, %v2023
      %2033 = vst.msk [vmem:[%s145 + $0x10] sm:$0xff] %vm2030, %v2024
      %2034 = vst.msk [vmem:[%s145 + $0x18] sm:$0xff] %vm2030, %v2025
      %2035 = vst.msk [vmem:[%s145 + $0x20] sm:$0xff] %vm2030, %v2026
      %2036 = vst.msk [vmem:[%s145 + $0x28] sm:$0xff] %vm2030, %v2027
      %2037 = vst.msk [vmem:[%s145 + $0x30] sm:$0xff] %vm2030, %v2028
      %2038 = vst.msk [vmem:[%s145 + $0x38] sm:$0xff] %vm2030, %v2029
      %s2039 = smul.u32 8, %s13
      %p2040 = scmp.lt.s32.totalorder %s2039, 15
      %s2041 = scalar_select %p2040, %s2039, 15
      %s2042 = smul.addr %s2041, 8
      %s2043 = scalar_lea.vmem %s2, %s2042
      // Predicated region
      $region29: #{tpu_custom_call.1} parent=27 // pred_check
        %p2044 = pneg %p78
      $region30: #{tpu_custom_call.1} parent=27 // pred_check_branch
        %2046 = sbr.rel (%p2044) target = $region32
      $region31: #{tpu_custom_call.1} parent=27 // pred_region
        %s2047 = smul.u32 8, %s13
      $region32: #{tpu_custom_call.1} parent=27 // pred_fallthru
        _
    $region28: #{tpu_custom_call.1} parent=5 // pred_fallthru
      _
    %p2048 = scmp.le.s32.totalorder 2, %s8
    // Predicated region
    $region33: #{tpu_custom_call.1} parent=5 // pred_check
      %p2049 = pneg %p2048
    $region34: #{tpu_custom_call.1} parent=5 // pred_check_branch
      %2051 = sbr.rel (%p2049) target = $region36
    $region35: #{tpu_custom_call.1} parent=5 // pred_region
      %s2052 = ssub.s32 %s8, 2
      // Predicated region
      $region37: #{tpu_custom_call.1} parent=35 // pred_check
        %p2053 = pneg %p84
      $region38: #{tpu_custom_call.1} parent=35 // pred_check_branch
        %2055 = sbr.rel (%p2053) target = $region40
      $region39: #{tpu_custom_call.1} parent=35 // pred_region
        %s2056 = smul.u32 8, %s14
        %p2057 = scmp.lt.s32.totalorder %s2056, 15
        %s2058 = scalar_select %p2057, %s2056, 15
        %s2059 = smul.addr %s2058, 8
        %s2060 = scalar_lea.vmem %s2, %s2059
      $region40: #{tpu_custom_call.1} parent=35 // pred_fallthru
        _
    $region36: #{tpu_custom_call.1} parent=5 // pred_fallthru
      _
  $region6: #{tpu_custom_call.1} parent=0 // loop_footer
    %s12 = sadd.s32 1, %s8
  $region7: #{tpu_custom_call.1} parent=0 // loop_footer_branch
    %7 = sbr.rel target = $region3
  $region8: #{tpu_custom_call.1} parent=0 // loop_exit
    _

</llo_original>
